<compile_context>
chip_gen: v5e
topology: v5e:2x2
jax: 0.10.0
libtpu: 0.0.40
codegen_flags: <defaults>
</compile_context>

<pallas_src>
import functools

import jax
import jax.numpy as jnp
from jax.experimental import pallas as pl
from jax.experimental.pallas import tpu as pltpu


# ----------------------------------------------------------------------------
# Fused kernel: PSLD perturbation + classifier matmul + CE loss + top-1 acc
# ----------------------------------------------------------------------------
def fused_psld_tce_kernel(c_ref, x_ref, m_ref, ex_ref, em_ref, w_ref, tb_ref,
                          lab_ref, loss_ref, top1_ref, acc_ref, *, reduce_mean):
    k = pl.program_id(0)

    # ---- init: seed accumulator with the time-conditioning bias -------------
    @pl.when(k == 0)
    def _():
        acc_ref[...] = tb_ref[...]

    # ---- PSLD perturbation of this D-tile (kept in f32: v5e-safe VPU math) --
    cxx = c_ref[:, 0:1]
    cxm = c_ref[:, 1:2]
    cmx = c_ref[:, 2:3]
    cmm = c_ref[:, 3:4]
    lxx = c_ref[:, 4:5]
    lmx = c_ref[:, 5:6]
    lmm = c_ref[:, 6:7]

    x = x_ref[...]
    m = m_ref[...]
    ex = ex_ref[...]
    em = em_ref[...]

    u_x = cxx * x + cxm * m + lxx * ex
    u_m = cmx * x + cmm * m + lmx * ex + lmm * em

    # ---- single fused contraction: [u_x | u_m] @ [W_x_tile ; W_m_tile] ------
    u = jnp.concatenate([u_x, u_m], axis=1).astype(jnp.bfloat16)   # (B, 2*tk)
    acc_ref[...] += jnp.dot(u, w_ref[...], preferred_element_type=jnp.float32)

    # ---- finalize: CE + top-1 straight from the in-VMEM accumulator ---------
    @pl.when(k == pl.num_programs(0) - 1)
    def _():
        logits = acc_ref[...]                          # (B, K) f32
        labels = lab_ref[...]                          # (B, 1) i32
        B, K = logits.shape

        col = jax.lax.broadcasted_iota(jnp.int32, (B, K), 1)
        onehot = (col == labels).astype(jnp.float32)

        row_max = jnp.max(logits, axis=-1, keepdims=True)           # (B, 1)
        lse = row_max + jnp.log(
            jnp.sum(jnp.exp(logits - row_max), axis=-1, keepdims=True))
        picked = jnp.sum(logits * onehot, axis=-1, keepdims=True)   # logit@label
        nll = lse - picked                                          # (B, 1)
        total = jnp.sum(nll, axis=0, keepdims=True)                 # (1, 1)
        loss_ref[...] = total / float(B) if reduce_mean else total

        # top-1 with torch.topk tie-breaking (first index of the row max)
        argmax_first = jnp.min(jnp.where(logits == row_max, col, K),
                               axis=-1, keepdims=True)
        correct = (argmax_first == labels).astype(jnp.float32)
        top1_ref[...] = jnp.sum(correct, axis=0, keepdims=True) / float(B)


def _pick_tk(B, D, K, *, budget_bytes=24 << 20):
    """Largest reduction tile whose double-buffered working set fits the budget
    (sized for v7x's smaller VMEM; also valid on v5e/v6e)."""
    assert D % 128 == 0, "flattened feature dim must be a multiple of 128"

    def step_bytes(tk):
        act = 4 * B * tk * 4        # x0, m0, eps_x, eps_m streams (f32)
        wgt = 2 * tk * K * 2        # concatenated bf16 weight tile
        return 2 * (act + wgt)      # double-buffered pipeline

    for tk in range(D, 0, -128):
        if D % tk == 0 and step_bytes(tk) <= budget_bytes:
            return tk
    return 128


def fused_psld_tce(coeffs, x0f, m0f, eps_x, eps_m, w_x, w_m, tbias, labels,
                   *, reduce_mean=True, vmem_budget_bytes=24 << 20):
    B, D = x0f.shape
    K = w_x.shape[1]
    tk = _pick_tk(B, D, K, budget_bytes=vmem_budget_bytes)
    nk = D // tk

    # Pre-tile & concatenate the classifier weights (layout plumbing only) so
    # each reduction step streams one contiguous (2*tk, K) bf16 block:
    #   rows [2*tk*k : 2*tk*(k+1)] = [W_x[k*tk:(k+1)*tk] ; W_m[k*tk:(k+1)*tk]]
    w_cat = jnp.concatenate(
        [w_x.astype(jnp.bfloat16).reshape(nk, tk, K),
         w_m.astype(jnp.bfloat16).reshape(nk, tk, K)], axis=1
    ).reshape(nk * 2 * tk, K)

    labels2 = labels.reshape(B, 1).astype(jnp.int32)

    loss, top1 = pl.pallas_call(
        functools.partial(fused_psld_tce_kernel, reduce_mean=reduce_mean),
        out_shape=(jax.ShapeDtypeStruct((1, 1), jnp.float32),
                   jax.ShapeDtypeStruct((1, 1), jnp.float32)),
        grid_spec=pltpu.PrefetchScalarGridSpec(
            num_scalar_prefetch=0,
            grid=(nk,),
            in_specs=[
                pl.BlockSpec((B, 8), lambda k: (0, 0)),        # perturb coeffs
                pl.BlockSpec((B, tk), lambda k: (0, k)),       # x_0 tile
                pl.BlockSpec((B, tk), lambda k: (0, k)),       # m_0 tile
                pl.BlockSpec((B, tk), lambda k: (0, k)),       # eps_x tile
                pl.BlockSpec((B, tk), lambda k: (0, k)),       # eps_m tile
                pl.BlockSpec((2 * tk, K), lambda k: (k, 0)),   # [W_x;W_m] bf16
                pl.BlockSpec((B, K), lambda k: (0, 0)),        # time bias
                pl.BlockSpec((B, 1), lambda k: (0, 0)),        # labels
            ],
            out_specs=(pl.BlockSpec((1, 1), lambda k: (0, 0)),
                       pl.BlockSpec((1, 1), lambda k: (0, 0))),
            scratch_shapes=[pltpu.VMEM((B, K), jnp.float32)],
        ),
        compiler_params=pltpu.CompilerParams(
            dimension_semantics=("arbitrary",),
            vmem_limit_bytes=32 * 1024 * 1024),
    )(coeffs, x0f, m0f, eps_x, eps_m, w_cat, tbias, labels2)
    return loss[0, 0], top1[0, 0]


# ----------------------------------------------------------------------------
# Glue: PSLD perturbation-kernel coefficients & classifier parameters
# ----------------------------------------------------------------------------
def psld_perturb_coeffs(t, mm_0, beta0=0.1, beta1=20.0):
    # TODO(synk): exact sde.perturb_data coefficients depend on the PSLD `sde`
    # config (not provided); a CLD-style critically-damped analytic kernel with
    # the same (2x2 affine mean + lower-triangular Cholesky) structure is used.
    b = beta0 * t + 0.5 * (beta1 - beta0) * t * t
    e = jnp.exp(-0.5 * b)
    mu_xx = e * (1.0 + 0.5 * b)
    mu_xm = e * b
    mu_mx = -0.25 * b * e
    mu_mm = e * (1.0 - 0.5 * b)
    var_x = jnp.maximum(1.0 - jnp.exp(-b) * (1.0 + b + 0.5 * b * b), 0.0)
    var_m = (jnp.maximum(1.0 - jnp.exp(-b) * (1.0 - b + 0.5 * b * b), 0.0)
             + mm_0 * jnp.exp(-b))
    l_xx = jnp.sqrt(var_x + 1e-12)
    l_mx = -0.25 * b * jnp.exp(-b)
    l_mm = jnp.sqrt(jnp.maximum(var_m - l_mx * l_mx, 1e-12))
    pad = jnp.zeros_like(t)
    return jnp.stack([mu_xx, mu_xm, mu_mx, mu_mm, l_xx, l_mx, l_mm, pad],
                     axis=-1).astype(jnp.float32)             # (B, 8)


def init_clf_params(key, D, K):
    k1, k2, k3 = jax.random.split(key, 3)
    scale = 1.0 / jnp.sqrt(jnp.float32(D))
    return dict(
        # classifier weights stored in bf16 (streamed as bf16, accumulated f32)
        w_x=(jax.random.normal(k1, (D, K), jnp.float32) * scale).astype(jnp.bfloat16),
        w_m=(jax.random.normal(k2, (D, K), jnp.float32) * scale).astype(jnp.bfloat16),
        w_t=jax.random.normal(k3, (4, K), jnp.float32) * 0.1,
        b=jnp.zeros((K,), jnp.float32),
    )


# ----------------------------------------------------------------------------
# Forward pass equivalent of PSLDTimeCELoss.forward
# ----------------------------------------------------------------------------
def psld_time_ce_loss(x_0, y, t, params, key, *, mode="dsm", sde_mm0=0.25,
                      reduce_mean=True):
    B = x_0.shape[0]
    D = x_0.shape[1] * x_0.shape[2] * x_0.shape[3]

    k1, k2, k3 = jax.random.split(key, 3)
    if mode == "hsm":
        m_0 = jnp.zeros_like(x_0)
        mm_0 = sde_mm0
    else:  # 'dsm'
        m_0 = jnp.sqrt(sde_mm0) * jax.random.normal(k1, x_0.shape, jnp.float32)
        mm_0 = 0.0

    eps_x = jax.random.normal(k2, x_0.shape, jnp.float32)   # eps for x half of u_0
    eps_m = jax.random.normal(k3, x_0.shape, jnp.float32)   # eps for m half of u_0

    coeffs = psld_perturb_coeffs(t, mm_0)                    # (B, 8)

    # time-conditioning of clf_fn(u_t, t): tiny per-sample bias (plain JAX glue)
    t_feat = jnp.stack([jnp.sin(2.0 * jnp.pi * t), jnp.cos(2.0 * jnp.pi * t),
                        t, jnp.ones_like(t)], axis=-1)       # (B, 4)
    tbias = t_feat @ params["w_t"] + params["b"][None, :]    # (B, K) f32

    x0f = x_0.reshape(B, D).astype(jnp.float32)
    m0f = m_0.reshape(B, D).astype(jnp.float32)
    exf = eps_x.reshape(B, D)
    emf = eps_m.reshape(B, D)

    return fused_psld_tce(coeffs, x0f, m0f, exf, emf,
                          params["w_x"], params["w_m"], tbias, y,
                          reduce_mean=reduce_mean)


if __name__ == "__main__":
    key = jax.random.PRNGKey(0)
    kx, ky, kt, kp, kn = jax.random.split(key, 5)

    B, C, H, W = 8, 4, 16, 16
    K = 128  # number of classes

    x_0 = jax.random.normal(kx, (B, C, H, W), jnp.float32)
    y = jax.random.randint(ky, (B,), 0, K, jnp.int32)
    t = jax.random.uniform(kt, (B,), jnp.float32, minval=1e-3, maxval=1.0)
    params = init_clf_params(kp, C * H * W, K)

    fwd = jax.jit(functools.partial(psld_time_ce_loss, mode="dsm",
                                    sde_mm0=0.25, reduce_mean=True))
    loss, acc = fwd(x_0, y, t, params, kn)
    jax.block_until_ready((loss, acc))
    print("KERNEL_OK")
</pallas_src>

<mosaic_0001>
module attributes {stable_mosaic.version = 11 : i64} {
  func.func @fused_psld_tce_kernel(%arg0: i32, %arg1: memref<8x8xf32, #tpu.memory_space<vmem>>, %arg2: memref<8x1024xf32, #tpu.memory_space<vmem>>, %arg3: memref<8x1024xf32, #tpu.memory_space<vmem>>, %arg4: memref<8x1024xf32, #tpu.memory_space<vmem>>, %arg5: memref<8x1024xf32, #tpu.memory_space<vmem>>, %arg6: memref<2048x128xbf16, #tpu.memory_space<vmem>>, %arg7: memref<8x128xf32, #tpu.memory_space<vmem>>, %arg8: memref<8x1xi32, #tpu.memory_space<vmem>>, %arg9: memref<1x1xf32, #tpu.memory_space<vmem>>, %arg10: memref<1x1xf32, #tpu.memory_space<vmem>>, %arg11: memref<8x128xf32, #tpu.memory_space<vmem>>) attributes {dimension_semantics = [#tpu.dimension_semantics<arbitrary>], iteration_bounds = array<i64: 1>, scalar_prefetch = 0 : i64, scratch_operands = 1 : i64, tpu.core_type = #tpu.core_type<tc>, window_params = [{pipeline_mode = #tpu.pipeline_mode<synchronous>, transform_indices = @transform_0, window_bounds = array<i64: 8, 8>}, {transform_indices = @transform_1, window_bounds = array<i64: 8, 1024>}, {transform_indices = @transform_2, window_bounds = array<i64: 8, 1024>}, {transform_indices = @transform_3, window_bounds = array<i64: 8, 1024>}, {transform_indices = @transform_4, window_bounds = array<i64: 8, 1024>}, {transform_indices = @transform_5, window_bounds = array<i64: 2048, 128>}, {pipeline_mode = #tpu.pipeline_mode<synchronous>, transform_indices = @transform_6, window_bounds = array<i64: 8, 128>}, {pipeline_mode = #tpu.pipeline_mode<synchronous>, transform_indices = @transform_7, window_bounds = array<i64: 8, 1>}, {pipeline_mode = #tpu.pipeline_mode<synchronous>, transform_indices = @transform_8, window_bounds = array<i64: 1, 1>}, {pipeline_mode = #tpu.pipeline_mode<synchronous>, transform_indices = @transform_9, window_bounds = array<i64: 1, 1>}]} {
    %c0_i32 = arith.constant 0 : i32
    %0 = arith.cmpi eq, %arg0, %c0_i32 : i32
    %1 = arith.extui %0 : i1 to i32
    %c0_i32_0 = arith.constant 0 : i32
    %2 = arith.cmpi ne, %1, %c0_i32_0 : i32
    scf.if %2 {
      %c0_24 = arith.constant 0 : index
      %c0_25 = arith.constant 0 : index
      %43 = vector.load %arg7[%c0_24, %c0_25] : memref<8x128xf32, #tpu.memory_space<vmem>>, vector<8x128xf32>
      %c0_26 = arith.constant 0 : index
      %c0_27 = arith.constant 0 : index
      %44 = vector.load %arg11[%c0_26, %c0_27] : memref<8x128xf32, #tpu.memory_space<vmem>>, vector<8x128xf32>
      tpu.vector_store %arg11[%c0_26, %c0_27], %43 {strides = array<i32>} : memref<8x128xf32, #tpu.memory_space<vmem>>, vector<8x128xf32>,
    } else {
    }
    %c0 = arith.constant 0 : index
    %c0_1 = arith.constant 0 : index
    %3 = vector.load %arg1[%c0, %c0_1] : memref<8x8xf32, #tpu.memory_space<vmem>>, vector<8x1xf32>
    %c0_2 = arith.constant 0 : index
    %c1 = arith.constant 1 : index
    %4 = vector.load %arg1[%c0_2, %c1] : memref<8x8xf32, #tpu.memory_space<vmem>>, vector<8x1xf32>
    %c0_3 = arith.constant 0 : index
    %c2 = arith.constant 2 : index
    %5 = vector.load %arg1[%c0_3, %c2] : memref<8x8xf32, #tpu.memory_space<vmem>>, vector<8x1xf32>
    %c0_4 = arith.constant 0 : index
    %c3 = arith.constant 3 : index
    %6 = vector.load %arg1[%c0_4, %c3] : memref<8x8xf32, #tpu.memory_space<vmem>>, vector<8x1xf32>
    %c0_5 = arith.constant 0 : index
    %c4 = arith.constant 4 : index
    %7 = vector.load %arg1[%c0_5, %c4] : memref<8x8xf32, #tpu.memory_space<vmem>>, vector<8x1xf32>
    %c0_6 = arith.constant 0 : index
    %c5 = arith.constant 5 : index
    %8 = vector.load %arg1[%c0_6, %c5] : memref<8x8xf32, #tpu.memory_space<vmem>>, vector<8x1xf32>
    %c0_7 = arith.constant 0 : index
    %c6 = arith.constant 6 : index
    %9 = vector.load %arg1[%c0_7, %c6] : memref<8x8xf32, #tpu.memory_space<vmem>>, vector<8x1xf32>
    %c0_8 = arith.constant 0 : index
    %c0_9 = arith.constant 0 : index
    %10 = vector.load %arg2[%c0_8, %c0_9] : memref<8x1024xf32, #tpu.memory_space<vmem>>, vector<8x1024xf32>
    %c0_10 = arith.constant 0 : index
    %c0_11 = arith.constant 0 : index
    %11 = vector.load %arg3[%c0_10, %c0_11] : memref<8x1024xf32, #tpu.memory_space<vmem>>, vector<8x1024xf32>
    %c0_12 = arith.constant 0 : index
    %c0_13 = arith.constant 0 : index
    %12 = vector.load %arg4[%c0_12, %c0_13] : memref<8x1024xf32, #tpu.memory_space<vmem>>, vector<8x1024xf32>
    %c0_14 = arith.constant 0 : index
    %c0_15 = arith.constant 0 : index
    %13 = vector.load %arg5[%c0_14, %c0_15] : memref<8x1024xf32, #tpu.memory_space<vmem>>, vector<8x1024xf32>
    %14 = vector.broadcast %3 : vector<8x1xf32> to vector<8x1024xf32>
    %15 = arith.mulf %14, %10 : vector<8x1024xf32>
    %16 = vector.broadcast %4 : vector<8x1xf32> to vector<8x1024xf32>
    %17 = arith.mulf %16, %11 : vector<8x1024xf32>
    %18 = arith.addf %15, %17 : vector<8x1024xf32>
    %19 = vector.broadcast %7 : vector<8x1xf32> to vector<8x1024xf32>
    %20 = arith.mulf %19, %12 : vector<8x1024xf32>
    %21 = arith.addf %18, %20 : vector<8x1024xf32>
    %22 = vector.broadcast %5 : vector<8x1xf32> to vector<8x1024xf32>
    %23 = arith.mulf %22, %10 : vector<8x1024xf32>
    %24 = vector.broadcast %6 : vector<8x1xf32> to vector<8x1024xf32>
    %25 = arith.mulf %24, %11 : vector<8x1024xf32>
    %26 = arith.addf %23, %25 : vector<8x1024xf32>
    %27 = vector.broadcast %8 : vector<8x1xf32> to vector<8x1024xf32>
    %28 = arith.mulf %27, %12 : vector<8x1024xf32>
    %29 = arith.addf %26, %28 : vector<8x1024xf32>
    %30 = vector.broadcast %9 : vector<8x1xf32> to vector<8x1024xf32>
    %31 = arith.mulf %30, %13 : vector<8x1024xf32>
    %32 = arith.addf %29, %31 : vector<8x1024xf32>
    %33 = tpu.concatenate %21, %32 in 1 : vector<8x1024xf32>, vector<8x1024xf32> -> vector<8x2048xf32>
    %34 = arith.truncf %33 : vector<8x2048xf32> to vector<8x2048xbf16>
    %c0_16 = arith.constant 0 : index
    %c0_17 = arith.constant 0 : index
    %35 = vector.load %arg11[%c0_16, %c0_17] : memref<8x128xf32, #tpu.memory_space<vmem>>, vector<8x128xf32>
    %c0_18 = arith.constant 0 : index
    %c0_19 = arith.constant 0 : index
    %36 = vector.load %arg6[%c0_18, %c0_19] : memref<2048x128xbf16, #tpu.memory_space<vmem>>, vector<2048x128xbf16>
    %cst = arith.constant dense<0.000000e+00> : vector<8x128xf32>
    %37 = tpu.matmul %34, %36, %cst {dimension_numbers = #tpu.dot_dimension_numbers<[1], [0], [0], [1], [0, 0, 1, 1], [], []>} : vector<8x2048xbf16>, vector<2048x128xbf16>, vector<8x128xf32> -> vector<8x128xf32>
    %38 = arith.addf %35, %37 : vector<8x128xf32>
    %c0_20 = arith.constant 0 : index
    %c0_21 = arith.constant 0 : index
    %39 = vector.load %arg11[%c0_20, %c0_21] : memref<8x128xf32, #tpu.memory_space<vmem>>, vector<8x128xf32>
    tpu.vector_store %arg11[%c0_20, %c0_21], %38 {strides = array<i32>} : memref<8x128xf32, #tpu.memory_space<vmem>>, vector<8x128xf32>,
    %c0_i32_22 = arith.constant 0 : i32
    %40 = arith.cmpi eq, %arg0, %c0_i32_22 : i32
    %41 = arith.extui %40 : i1 to i32
    %c0_i32_23 = arith.constant 0 : i32
    %42 = arith.cmpi ne, %41, %c0_i32_23 : i32
    scf.if %42 {
      %c0_24 = arith.constant 0 : index
      %c0_25 = arith.constant 0 : index
      %43 = vector.load %arg11[%c0_24, %c0_25] : memref<8x128xf32, #tpu.memory_space<vmem>>, vector<8x128xf32>
      %c0_26 = arith.constant 0 : index
      %c0_27 = arith.constant 0 : index
      %44 = vector.load %arg8[%c0_26, %c0_27] : memref<8x1xi32, #tpu.memory_space<vmem>>, vector<8x1xi32>
      %45 = tpu.iota {dimensions = array<i32: 1>} : vector<8x128xi32>
      %46 = vector.broadcast %44 : vector<8x1xi32> to vector<8x128xi32>
      %47 = arith.cmpi eq, %45, %46 : vector<8x128xi32>
      %48 = arith.extui %47 : vector<8x128xi1> to vector<8x128xi32>
      %49 = arith.sitofp %48 : vector<8x128xi32> to vector<8x128xf32>
      %cst_28 = arith.constant dense<0xFF800000> : vector<8xf32>
      %50 = vector.multi_reduction <maximumf>, %43, %cst_28 [1] : vector<8x128xf32> to vector<8xf32>
      %51 = vector.shape_cast %50 : vector<8xf32> to vector<8x1xf32>
      %52 = vector.broadcast %51 : vector<8x1xf32> to vector<8x128xf32>
      %53 = arith.subf %43, %52 : vector<8x128xf32>
      %54 = math.exp %53 : vector<8x128xf32>
      %cst_29 = arith.constant dense<0.000000e+00> : vector<8xf32>
      %55 = vector.multi_reduction <add>, %54, %cst_29 [1] : vector<8x128xf32> to vector<8xf32>
      %56 = vector.shape_cast %55 : vector<8xf32> to vector<8x1xf32>
      %57 = math.log %56 : vector<8x1xf32>
      %58 = arith.addf %51, %57 : vector<8x1xf32>
      %59 = arith.mulf %43, %49 : vector<8x128xf32>
      %cst_30 = arith.constant dense<0.000000e+00> : vector<8xf32>
      %60 = vector.multi_reduction <add>, %59, %cst_30 [1] : vector<8x128xf32> to vector<8xf32>
      %61 = vector.shape_cast %60 : vector<8xf32> to vector<8x1xf32>
      %62 = arith.subf %58, %61 : vector<8x1xf32>
      %cst_31 = arith.constant dense<0.000000e+00> : vector<1xf32>
      %63 = vector.multi_reduction <add>, %62, %cst_31 [0] : vector<8x1xf32> to vector<1xf32>
      %64 = vector.shape_cast %63 : vector<1xf32> to vector<1x1xf32>
      %cst_32 = arith.constant 8.000000e+00 : f32
      %65 = vector.broadcast %cst_32 : f32 to vector<1x1xf32>
      %66 = arith.divf %64, %65 : vector<1x1xf32>
      %c0_33 = arith.constant 0 : index
      %c0_34 = arith.constant 0 : index
      %67 = vector.load %arg9[%c0_33, %c0_34] : memref<1x1xf32, #tpu.memory_space<vmem>>, vector<1x1xf32>
      tpu.vector_store %arg9[%c0_33, %c0_34], %66 {strides = array<i32>} : memref<1x1xf32, #tpu.memory_space<vmem>>, vector<1x1xf32>,
      %68 = vector.broadcast %51 : vector<8x1xf32> to vector<8x128xf32>
      %69 = arith.cmpf oeq, %43, %68 : vector<8x128xf32>
      %c128_i32 = arith.constant 128 : i32
      %70 = vector.broadcast %c128_i32 : i32 to vector<8x128xi32>
      %71 = arith.select %69, %45, %70 : vector<8x128xi1>, vector<8x128xi32>
      %cst_35 = arith.constant dense<2147483647> : vector<8xi32>
      %72 = vector.multi_reduction <minsi>, %71, %cst_35 [1] : vector<8x128xi32> to vector<8xi32>
      %73 = vector.shape_cast %72 : vector<8xi32> to vector<8x1xi32>
      %74 = arith.cmpi eq, %73, %44 : vector<8x1xi32>
      %75 = arith.extui %74 : vector<8x1xi1> to vector<8x1xi32>
      %76 = arith.sitofp %75 : vector<8x1xi32> to vector<8x1xf32>
      %cst_36 = arith.constant dense<0.000000e+00> : vector<1xf32>
      %77 = vector.multi_reduction <add>, %76, %cst_36 [0] : vector<8x1xf32> to vector<1xf32>
      %78 = vector.shape_cast %77 : vector<1xf32> to vector<1x1xf32>
      %cst_37 = arith.constant 8.000000e+00 : f32
      %79 = vector.broadcast %cst_37 : f32 to vector<1x1xf32>
      %80 = arith.divf %78, %79 : vector<1x1xf32>
      %c0_38 = arith.constant 0 : index
      %c0_39 = arith.constant 0 : index
      %81 = vector.load %arg10[%c0_38, %c0_39] : memref<1x1xf32, #tpu.memory_space<vmem>>, vector<1x1xf32>
      tpu.vector_store %arg10[%c0_38, %c0_39], %80 {strides = array<i32>} : memref<1x1xf32, #tpu.memory_space<vmem>>, vector<1x1xf32>,
    } else {
    }
    return
  }
  func.func @transform_0(%arg0: i32) -> (i32, i32) {
    %c0_i32 = arith.constant 0 : i32
    %c0_i32_0 = arith.constant 0 : i32
    %c0_i32_1 = arith.constant 0 : i32
    return %c0_i32, %c0_i32_0 : i32, i32
  }
  func.func @transform_1(%arg0: i32) -> (i32, i32) {
    %c0_i32 = arith.constant 0 : i32
    %c0_i32_0 = arith.constant 0 : i32
    return %c0_i32, %arg0 : i32, i32
  }
  func.func @transform_2(%arg0: i32) -> (i32, i32) {
    %c0_i32 = arith.constant 0 : i32
    %c0_i32_0 = arith.constant 0 : i32
    return %c0_i32, %arg0 : i32, i32
  }
  func.func @transform_3(%arg0: i32) -> (i32, i32) {
    %c0_i32 = arith.constant 0 : i32
    %c0_i32_0 = arith.constant 0 : i32
    return %c0_i32, %arg0 : i32, i32
  }
  func.func @transform_4(%arg0: i32) -> (i32, i32) {
    %c0_i32 = arith.constant 0 : i32
    %c0_i32_0 = arith.constant 0 : i32
    return %c0_i32, %arg0 : i32, i32
  }
  func.func @transform_5(%arg0: i32) -> (i32, i32) {
    %c0_i32 = arith.constant 0 : i32
    %c0_i32_0 = arith.constant 0 : i32
    return %arg0, %c0_i32 : i32, i32
  }
  func.func @transform_6(%arg0: i32) -> (i32, i32) {
    %c0_i32 = arith.constant 0 : i32
    %c0_i32_0 = arith.constant 0 : i32
    %c0_i32_1 = arith.constant 0 : i32
    return %c0_i32, %c0_i32_0 : i32, i32
  }
  func.func @transform_7(%arg0: i32) -> (i32, i32) {
    %c0_i32 = arith.constant 0 : i32
    %c0_i32_0 = arith.constant 0 : i32
    %c0_i32_1 = arith.constant 0 : i32
    return %c0_i32, %c0_i32_0 : i32, i32
  }
  func.func @transform_8(%arg0: i32) -> (i32, i32) {
    %c0_i32 = arith.constant 0 : i32
    %c0_i32_0 = arith.constant 0 : i32
    %c0_i32_1 = arith.constant 0 : i32
    return %c0_i32, %c0_i32_0 : i32, i32
  }
  func.func @transform_9(%arg0: i32) -> (i32, i32) {
    %c0_i32 = arith.constant 0 : i32
    %c0_i32_0 = arith.constant 0 : i32
    %c0_i32_1 = arith.constant 0 : i32
    return %c0_i32, %c0_i32_0 : i32, i32
  }
}

</mosaic_0001>

<llo_original>
// kernel: psld_time_ce_loss.3
$region0: #{psld_time_ce_loss.3}
  #allocation0 [shape = 'u32[]', space=smem, size = 0x4, offset = 0x4, fixed_abs, tag = 'smem constant byte address 0x4 - core index']
  #allocation1 [shape = 'u32[72,128]{1,0:T(1,128)}', space=vmem, size = 0x9000, scoped, tag = 'internal scratch']
  #allocation2 [shape = 'f32[8,128]{1,0:T(8,128)}', space=vmem, size = 0x1000, scoped, tag = 'scratch operand']
  %s0 = inlined_call_operand.vmem [shape: f32[8,8], index: 0, kind: input, shape index: {}]
  %s1 = inlined_call_operand.vmem [shape: f32[8,1024], index: 1, kind: input, shape index: {}]
  %s2 = inlined_call_operand.vmem [shape: f32[8,1024], index: 2, kind: input, shape index: {}]
  %s3 = inlined_call_operand.vmem [shape: f32[8,1024], index: 3, kind: input, shape index: {}]
  %s4 = inlined_call_operand.vmem [shape: f32[8,1024], index: 4, kind: input, shape index: {}]
  %s5 = inlined_call_operand.vmem [shape: bf16[2048,128], index: 5, kind: input, shape index: {}]
  %s6 = inlined_call_operand.vmem [shape: f32[8,128], index: 6, kind: input, shape index: {}]
  %s7 = inlined_call_operand.vmem [shape: s32[8,1], index: 7, kind: input, shape index: {}]
  %s8 = inlined_call_operand.hbm [shape: f32[1,1], index: 8, kind: output, shape index: {0}]
  %s9 = inlined_call_operand.hbm [shape: f32[1,1], index: 9, kind: output, shape index: {1}]
  %10 = xla_tuple %s8, %s9
  %s11 = sld [smem:[#allocation0]]
  $region58: #{psld_time_ce_loss.3} parent=0
    _
  %s13 = ssub.s32 1, %s11
  %s14 = scalar_select 0, %s13, %s11
  $region1: #{psld_time_ce_loss.3} parent=0
    #allocation3 [shape = 'u8[512]{0}', space=vmem, size = 0x400, scoped, tag = 'output window, operand 0, single buffered']
    #allocation4 [shape = 's32[1]{0}', space=sflag, size = 0x4, scoped, tag = 'scoped memory for psld_time_ce_loss.3']
    #allocation5 [shape = 'u8[512]{0}', space=vmem, size = 0x400, scoped, tag = 'output window, operand 1, single buffered']
    #allocation6 [shape = 's32[1]{0}', space=sflag, size = 0x4, scoped, tag = 'scoped memory for psld_time_ce_loss.3']
    %15 = vsyncpa [#allocation4], 0
    %16 = vsyncpa [#allocation6], 0
    // Predicated region
    $region2: #{psld_time_ce_loss.3} parent=1 // pred_check
      _
    $region3: #{psld_time_ce_loss.3} parent=1 // pred_check_branch
      %18 = sbr.rel (0) target = $region5
    $region4: #{psld_time_ce_loss.3} parent=1 // pred_region
      _
    $region5: #{psld_time_ce_loss.3} parent=1 // pred_fallthru
      _
    // Predicated region
    $region6: #{psld_time_ce_loss.3} parent=1 // pred_check
      _
    $region7: #{psld_time_ce_loss.3} parent=1 // pred_check_branch
      %20 = sbr.rel (0) target = $region9
    $region8: #{psld_time_ce_loss.3} parent=1 // pred_region
      _
    $region9: #{psld_time_ce_loss.3} parent=1 // pred_fallthru
      _
    // Predicated region
    $region10: #{psld_time_ce_loss.3} parent=1 // pred_check
      _
    $region11: #{psld_time_ce_loss.3} parent=1 // pred_check_branch
      %22 = sbr.rel (0) target = $region13
    $region12: #{psld_time_ce_loss.3} parent=1 // pred_region
      _
    $region13: #{psld_time_ce_loss.3} parent=1 // pred_fallthru
      _
    // Predicated region
    $region14: #{psld_time_ce_loss.3} parent=1 // pred_check
      _
    $region15: #{psld_time_ce_loss.3} parent=1 // pred_check_branch
      %24 = sbr.rel (0) target = $region17
    $region16: #{psld_time_ce_loss.3} parent=1 // pred_region
      _
    $region17: #{psld_time_ce_loss.3} parent=1 // pred_fallthru
      _
    // Predicated region
    $region18: #{psld_time_ce_loss.3} parent=1 // pred_check
      _
    $region19: #{psld_time_ce_loss.3} parent=1 // pred_check_branch
      %26 = sbr.rel (0) target = $region21
    $region20: #{psld_time_ce_loss.3} parent=1 // pred_region
      _
    $region21: #{psld_time_ce_loss.3} parent=1 // pred_fallthru
      _
    // Predicated region
    $region22: #{psld_time_ce_loss.3} parent=1 // pred_check
      _
    $region23: #{psld_time_ce_loss.3} parent=1 // pred_check_branch
      %28 = sbr.rel (0) target = $region25
    $region24: #{psld_time_ce_loss.3} parent=1 // pred_region
      _
    $region25: #{psld_time_ce_loss.3} parent=1 // pred_fallthru
      _
    // Predicated region
    $region26: #{psld_time_ce_loss.3} parent=1 // pred_check
      _
    $region27: #{psld_time_ce_loss.3} parent=1 // pred_check_branch
      %30 = sbr.rel (0) target = $region29
    $region28: #{psld_time_ce_loss.3} parent=1 // pred_region
      _
    $region29: #{psld_time_ce_loss.3} parent=1 // pred_fallthru
      _
    // Predicated region
    $region30: #{psld_time_ce_loss.3} parent=1 // pred_check
      _
    $region31: #{psld_time_ce_loss.3} parent=1 // pred_check_branch
      %32 = sbr.rel (0) target = $region33
    $region32: #{psld_time_ce_loss.3} parent=1 // pred_region
      _
    $region33: #{psld_time_ce_loss.3} parent=1 // pred_fallthru
      _
    %p33 = scmp.eq.s32.totalorder 0, 0
    // Predicated region
    $region34: #{psld_time_ce_loss.3} parent=1 // pred_check
      %p34 = pneg %p33
    $region35: #{psld_time_ce_loss.3} parent=1 // pred_check_branch
      %36 = sbr.rel (%p34) target = $region37
    $region36: #{psld_time_ce_loss.3} parent=1 // pred_region
      %v37 = vld [vmem:[%s6] sm:$0xff]
      %38 = vst [vmem:[#allocation2] sm:$0xff] %v37
    $region37: #{psld_time_ce_loss.3} parent=1 // pred_fallthru
      _
    %v39 = vld [vmem:[%s0] sm:$0xff]
    %v40 = vld [vmem:[%s1] sm:$0xff]
    %v41 = vld [vmem:[%s1 + $0x8] sm:$0xff]
    %v42 = vld [vmem:[%s1 + $0x10] sm:$0xff]
    %v43 = vld [vmem:[%s1 + $0x18] sm:$0xff]
    %v44 = vld [vmem:[%s1 + $0x20] sm:$0xff]
    %v45 = vld [vmem:[%s1 + $0x28] sm:$0xff]
    %v46 = vld [vmem:[%s1 + $0x30] sm:$0xff]
    %v47 = vld [vmem:[%s1 + $0x38] sm:$0xff]
    %v48 = vld [vmem:[%s2] sm:$0xff]
    %v49 = vld [vmem:[%s2 + $0x8] sm:$0xff]
    %v50 = vld [vmem:[%s2 + $0x10] sm:$0xff]
    %v51 = vld [vmem:[%s2 + $0x18] sm:$0xff]
    %v52 = vld [vmem:[%s2 + $0x20] sm:$0xff]
    %v53 = vld [vmem:[%s2 + $0x28] sm:$0xff]
    %v54 = vld [vmem:[%s2 + $0x30] sm:$0xff]
    %v55 = vld [vmem:[%s2 + $0x38] sm:$0xff]
    %v56 = vld [vmem:[%s3] sm:$0xff]
    %v57 = vld [vmem:[%s3 + $0x8] sm:$0xff]
    %v58 = vld [vmem:[%s3 + $0x10] sm:$0xff]
    %v59 = vld [vmem:[%s3 + $0x18] sm:$0xff]
    %v60 = vld [vmem:[%s3 + $0x20] sm:$0xff]
    %v61 = vld [vmem:[%s3 + $0x28] sm:$0xff]
    %v62 = vld [vmem:[%s3 + $0x30] sm:$0xff]
    %v63 = vld [vmem:[%s3 + $0x38] sm:$0xff]
    %v64 = vld [vmem:[%s4] sm:$0xff]
    %v65 = vld [vmem:[%s4 + $0x8] sm:$0xff]
    %v66 = vld [vmem:[%s4 + $0x10] sm:$0xff]
    %v67 = vld [vmem:[%s4 + $0x18] sm:$0xff]
    %v68 = vld [vmem:[%s4 + $0x20] sm:$0xff]
    %v69 = vld [vmem:[%s4 + $0x28] sm:$0xff]
    %v70 = vld [vmem:[%s4 + $0x30] sm:$0xff]
    %v71 = vld [vmem:[%s4 + $0x38] sm:$0xff]
    %73 = vset.pattern.permute.xlu0 0
    %74 = vperm.xlu0 %73, %v39
    %v75 = vpop.permute.xlu0 %74
    %v77 = vmul.f32 %v75, %v40
    %v78 = vmul.f32 %v75, %v41
    %v79 = vmul.f32 %v75, %v42
    %v80 = vmul.f32 %v75, %v43
    %v81 = vmul.f32 %v75, %v44
    %v82 = vmul.f32 %v75, %v45
    %v83 = vmul.f32 %v75, %v46
    %v84 = vmul.f32 %v75, %v47
    %85 = vset.pattern.permute.xlu0 1
    %86 = vperm.xlu0 %85, %v39
    %v87 = vpop.permute.xlu0 %86
    %v89 = vmul.f32 %v87, %v48
    %v90 = vmul.f32 %v87, %v49
    %v91 = vmul.f32 %v87, %v50
    %v92 = vmul.f32 %v87, %v51
    %v93 = vmul.f32 %v87, %v52
    %v94 = vmul.f32 %v87, %v53
    %v95 = vmul.f32 %v87, %v54
    %v96 = vmul.f32 %v87, %v55
    %v97 = vadd.f32 %v77, %v89
    %v98 = vadd.f32 %v78, %v90
    %v99 = vadd.f32 %v79, %v91
    %v100 = vadd.f32 %v80, %v92
    %v101 = vadd.f32 %v81, %v93
    %v102 = vadd.f32 %v82, %v94
    %v103 = vadd.f32 %v83, %v95
    %v104 = vadd.f32 %v84, %v96
    %105 = vset.pattern.permute.xlu0 4
    %106 = vperm.xlu0 %105, %v39
    %v107 = vpop.permute.xlu0 %106
    %v109 = vmul.f32 %v107, %v56
    %v110 = vmul.f32 %v107, %v57
    %v111 = vmul.f32 %v107, %v58
    %v112 = vmul.f32 %v107, %v59
    %v113 = vmul.f32 %v107, %v60
    %v114 = vmul.f32 %v107, %v61
    %v115 = vmul.f32 %v107, %v62
    %v116 = vmul.f32 %v107, %v63
    %v117 = vadd.f32 %v97, %v109
    %v118 = vadd.f32 %v98, %v110
    %v119 = vadd.f32 %v99, %v111
    %v120 = vadd.f32 %v100, %v112
    %v121 = vadd.f32 %v101, %v113
    %v122 = vadd.f32 %v102, %v114
    %v123 = vadd.f32 %v103, %v115
    %v124 = vadd.f32 %v104, %v116
    %125 = vset.pattern.permute.xlu0 2
    %126 = vperm.xlu0 %125, %v39
    %v127 = vpop.permute.xlu0 %126
    %v129 = vmul.f32 %v127, %v40
    %v130 = vmul.f32 %v127, %v41
    %v131 = vmul.f32 %v127, %v42
    %v132 = vmul.f32 %v127, %v43
    %v133 = vmul.f32 %v127, %v44
    %v134 = vmul.f32 %v127, %v45
    %v135 = vmul.f32 %v127, %v46
    %v136 = vmul.f32 %v127, %v47
    %137 = vset.pattern.permute.xlu0 3
    %138 = vperm.xlu0 %137, %v39
    %v139 = vpop.permute.xlu0 %138
    %v141 = vmul.f32 %v139, %v48
    %v142 = vmul.f32 %v139, %v49
    %v143 = vmul.f32 %v139, %v50
    %v144 = vmul.f32 %v139, %v51
    %v145 = vmul.f32 %v139, %v52
    %v146 = vmul.f32 %v139, %v53
    %v147 = vmul.f32 %v139, %v54
    %v148 = vmul.f32 %v139, %v55
    %v149 = vadd.f32 %v129, %v141
    %v150 = vadd.f32 %v130, %v142
    %v151 = vadd.f32 %v131, %v143
    %v152 = vadd.f32 %v132, %v144
    %v153 = vadd.f32 %v133, %v145
    %v154 = vadd.f32 %v134, %v146
    %v155 = vadd.f32 %v135, %v147
    %v156 = vadd.f32 %v136, %v148
    %157 = vset.pattern.permute.xlu0 5
    %158 = vperm.xlu0 %157, %v39
    %v159 = vpop.permute.xlu0 %158
    %v161 = vmul.f32 %v159, %v56
    %v162 = vmul.f32 %v159, %v57
    %v163 = vmul.f32 %v159, %v58
    %v164 = vmul.f32 %v159, %v59
    %v165 = vmul.f32 %v159, %v60
    %v166 = vmul.f32 %v159, %v61
    %v167 = vmul.f32 %v159, %v62
    %v168 = vmul.f32 %v159, %v63
    %v169 = vadd.f32 %v149, %v161
    %v170 = vadd.f32 %v150, %v162
    %v171 = vadd.f32 %v151, %v163
    %v172 = vadd.f32 %v152, %v164
    %v173 = vadd.f32 %v153, %v165
    %v174 = vadd.f32 %v154, %v166
    %v175 = vadd.f32 %v155, %v167
    %v176 = vadd.f32 %v156, %v168
    %177 = vset.pattern.permute.xlu0 6
    %178 = vperm.xlu0 %177, %v39
    %v179 = vpop.permute.xlu0 %178
    %v181 = vmul.f32 %v179, %v64
    %v182 = vmul.f32 %v179, %v65
    %v183 = vmul.f32 %v179, %v66
    %v184 = vmul.f32 %v179, %v67
    %v185 = vmul.f32 %v179, %v68
    %v186 = vmul.f32 %v179, %v69
    %v187 = vmul.f32 %v179, %v70
    %v188 = vmul.f32 %v179, %v71
    %v189 = vadd.f32 %v169, %v181
    %v190 = vadd.f32 %v170, %v182
    %v191 = vadd.f32 %v171, %v183
    %v192 = vadd.f32 %v172, %v184
    %v193 = vadd.f32 %v173, %v185
    %v194 = vadd.f32 %v174, %v186
    %v195 = vadd.f32 %v175, %v187
    %v196 = vadd.f32 %v176, %v188
    %v197 = vpack.c.bf16 %v117, %v117
    %v198 = vpack.c.bf16 %v118, %v118
    %v199 = vpack.c.bf16 %v119, %v119
    %v200 = vpack.c.bf16 %v120, %v120
    %v201 = vpack.c.bf16 %v121, %v121
    %v202 = vpack.c.bf16 %v122, %v122
    %v203 = vpack.c.bf16 %v123, %v123
    %v204 = vpack.c.bf16 %v124, %v124
    %v205 = vpack.c.bf16 %v189, %v189
    %v206 = vpack.c.bf16 %v190, %v190
    %v207 = vpack.c.bf16 %v191, %v191
    %v208 = vpack.c.bf16 %v192, %v192
    %v209 = vpack.c.bf16 %v193, %v193
    %v210 = vpack.c.bf16 %v194, %v194
    %v211 = vpack.c.bf16 %v195, %v195
    %v212 = vpack.c.bf16 %v196, %v196
    %v213 = vld [vmem:[#allocation2] sm:$0xff]
    %v214 = vld [vmem:[%s5] sm:$0xf]
    %v215 = vld [vmem:[%s5 + $0x4] sm:$0xf]
    %v216 = vld [vmem:[%s5 + $0x8] sm:$0xf]
    %v217 = vld [vmem:[%s5 + $0xc] sm:$0xf]
    %v218 = vld [vmem:[%s5 + $0x10] sm:$0xf]
    %v219 = vld [vmem:[%s5 + $0x14] sm:$0xf]
    %v220 = vld [vmem:[%s5 + $0x18] sm:$0xf]
    %v221 = vld [vmem:[%s5 + $0x1c] sm:$0xf]
    %v222 = vld [vmem:[%s5 + $0x20] sm:$0xf]
    %v223 = vld [vmem:[%s5 + $0x24] sm:$0xf]
    %v224 = vld [vmem:[%s5 + $0x28] sm:$0xf]
    %v225 = vld [vmem:[%s5 + $0x2c] sm:$0xf]
    %v226 = vld [vmem:[%s5 + $0x30] sm:$0xf]
    %v227 = vld [vmem:[%s5 + $0x34] sm:$0xf]
    %v228 = vld [vmem:[%s5 + $0x38] sm:$0xf]
    %v229 = vld [vmem:[%s5 + $0x3c] sm:$0xf]
    %v230 = vld [vmem:[%s5 + $0x40] sm:$0xf]
    %v231 = vld [vmem:[%s5 + $0x44] sm:$0xf]
    %v232 = vld [vmem:[%s5 + $0x48] sm:$0xf]
    %v233 = vld [vmem:[%s5 + $0x4c] sm:$0xf]
    %v234 = vld [vmem:[%s5 + $0x50] sm:$0xf]
    %v235 = vld [vmem:[%s5 + $0x54] sm:$0xf]
    %v236 = vld [vmem:[%s5 + $0x58] sm:$0xf]
    %v237 = vld [vmem:[%s5 + $0x5c] sm:$0xf]
    %v238 = vld [vmem:[%s5 + $0x60] sm:$0xf]
    %v239 = vld [vmem:[%s5 + $0x64] sm:$0xf]
    %v240 = vld [vmem:[%s5 + $0x68] sm:$0xf]
    %v241 = vld [vmem:[%s5 + $0x6c] sm:$0xf]
    %v242 = vld [vmem:[%s5 + $0x70] sm:$0xf]
    %v243 = vld [vmem:[%s5 + $0x74] sm:$0xf]
    %v244 = vld [vmem:[%s5 + $0x78] sm:$0xf]
    %v245 = vld [vmem:[%s5 + $0x7c] sm:$0xf]
    %v246 = vld [vmem:[%s5 + $0x80] sm:$0xf]
    %v247 = vld [vmem:[%s5 + $0x84] sm:$0xf]
    %v248 = vld [vmem:[%s5 + $0x88] sm:$0xf]
    %v249 = vld [vmem:[%s5 + $0x8c] sm:$0xf]
    %v250 = vld [vmem:[%s5 + $0x90] sm:$0xf]
    %v251 = vld [vmem:[%s5 + $0x94] sm:$0xf]
    %v252 = vld [vmem:[%s5 + $0x98] sm:$0xf]
    %v253 = vld [vmem:[%s5 + $0x9c] sm:$0xf]
    %v254 = vld [vmem:[%s5 + $0xa0] sm:$0xf]
    %v255 = vld [vmem:[%s5 + $0xa4] sm:$0xf]
    %v256 = vld [vmem:[%s5 + $0xa8] sm:$0xf]
    %v257 = vld [vmem:[%s5 + $0xac] sm:$0xf]
    %v258 = vld [vmem:[%s5 + $0xb0] sm:$0xf]
    %v259 = vld [vmem:[%s5 + $0xb4] sm:$0xf]
    %v260 = vld [vmem:[%s5 + $0xb8] sm:$0xf]
    %v261 = vld [vmem:[%s5 + $0xbc] sm:$0xf]
    %v262 = vld [vmem:[%s5 + $0xc0] sm:$0xf]
    %v263 = vld [vmem:[%s5 + $0xc4] sm:$0xf]
    %v264 = vld [vmem:[%s5 + $0xc8] sm:$0xf]
    %v265 = vld [vmem:[%s5 + $0xcc] sm:$0xf]
    %v266 = vld [vmem:[%s5 + $0xd0] sm:$0xf]
    %v267 = vld [vmem:[%s5 + $0xd4] sm:$0xf]
    %v268 = vld [vmem:[%s5 + $0xd8] sm:$0xf]
    %v269 = vld [vmem:[%s5 + $0xdc] sm:$0xf]
    %v270 = vld [vmem:[%s5 + $0xe0] sm:$0xf]
    %v271 = vld [vmem:[%s5 + $0xe4] sm:$0xf]
    %v272 = vld [vmem:[%s5 + $0xe8] sm:$0xf]
    %v273 = vld [vmem:[%s5 + $0xec] sm:$0xf]
    %v274 = vld [vmem:[%s5 + $0xf0] sm:$0xf]
    %v275 = vld [vmem:[%s5 + $0xf4] sm:$0xf]
    %v276 = vld [vmem:[%s5 + $0xf8] sm:$0xf]
    %v277 = vld [vmem:[%s5 + $0xfc] sm:$0xf]
    %v278 = vld [vmem:[%s5 + $0x100] sm:$0xf]
    %v279 = vld [vmem:[%s5 + $0x104] sm:$0xf]
    %v280 = vld [vmem:[%s5 + $0x108] sm:$0xf]
    %v281 = vld [vmem:[%s5 + $0x10c] sm:$0xf]
    %v282 = vld [vmem:[%s5 + $0x110] sm:$0xf]
    %v283 = vld [vmem:[%s5 + $0x114] sm:$0xf]
    %v284 = vld [vmem:[%s5 + $0x118] sm:$0xf]
    %v285 = vld [vmem:[%s5 + $0x11c] sm:$0xf]
    %v286 = vld [vmem:[%s5 + $0x120] sm:$0xf]
    %v287 = vld [vmem:[%s5 + $0x124] sm:$0xf]
    %v288 = vld [vmem:[%s5 + $0x128] sm:$0xf]
    %v289 = vld [vmem:[%s5 + $0x12c] sm:$0xf]
    %v290 = vld [vmem:[%s5 + $0x130] sm:$0xf]
    %v291 = vld [vmem:[%s5 + $0x134] sm:$0xf]
    %v292 = vld [vmem:[%s5 + $0x138] sm:$0xf]
    %v293 = vld [vmem:[%s5 + $0x13c] sm:$0xf]
    %v294 = vld [vmem:[%s5 + $0x140] sm:$0xf]
    %v295 = vld [vmem:[%s5 + $0x144] sm:$0xf]
    %v296 = vld [vmem:[%s5 + $0x148] sm:$0xf]
    %v297 = vld [vmem:[%s5 + $0x14c] sm:$0xf]
    %v298 = vld [vmem:[%s5 + $0x150] sm:$0xf]
    %v299 = vld [vmem:[%s5 + $0x154] sm:$0xf]
    %v300 = vld [vmem:[%s5 + $0x158] sm:$0xf]
    %v301 = vld [vmem:[%s5 + $0x15c] sm:$0xf]
    %v302 = vld [vmem:[%s5 + $0x160] sm:$0xf]
    %v303 = vld [vmem:[%s5 + $0x164] sm:$0xf]
    %v304 = vld [vmem:[%s5 + $0x168] sm:$0xf]
    %v305 = vld [vmem:[%s5 + $0x16c] sm:$0xf]
    %v306 = vld [vmem:[%s5 + $0x170] sm:$0xf]
    %v307 = vld [vmem:[%s5 + $0x174] sm:$0xf]
    %v308 = vld [vmem:[%s5 + $0x178] sm:$0xf]
    %v309 = vld [vmem:[%s5 + $0x17c] sm:$0xf]
    %v310 = vld [vmem:[%s5 + $0x180] sm:$0xf]
    %v311 = vld [vmem:[%s5 + $0x184] sm:$0xf]
    %v312 = vld [vmem:[%s5 + $0x188] sm:$0xf]
    %v313 = vld [vmem:[%s5 + $0x18c] sm:$0xf]
    %v314 = vld [vmem:[%s5 + $0x190] sm:$0xf]
    %v315 = vld [vmem:[%s5 + $0x194] sm:$0xf]
    %v316 = vld [vmem:[%s5 + $0x198] sm:$0xf]
    %v317 = vld [vmem:[%s5 + $0x19c] sm:$0xf]
    %v318 = vld [vmem:[%s5 + $0x1a0] sm:$0xf]
    %v319 = vld [vmem:[%s5 + $0x1a4] sm:$0xf]
    %v320 = vld [vmem:[%s5 + $0x1a8] sm:$0xf]
    %v321 = vld [vmem:[%s5 + $0x1ac] sm:$0xf]
    %v322 = vld [vmem:[%s5 + $0x1b0] sm:$0xf]
    %v323 = vld [vmem:[%s5 + $0x1b4] sm:$0xf]
    %v324 = vld [vmem:[%s5 + $0x1b8] sm:$0xf]
    %v325 = vld [vmem:[%s5 + $0x1bc] sm:$0xf]
    %v326 = vld [vmem:[%s5 + $0x1c0] sm:$0xf]
    %v327 = vld [vmem:[%s5 + $0x1c4] sm:$0xf]
    %v328 = vld [vmem:[%s5 + $0x1c8] sm:$0xf]
    %v329 = vld [vmem:[%s5 + $0x1cc] sm:$0xf]
    %v330 = vld [vmem:[%s5 + $0x1d0] sm:$0xf]
    %v331 = vld [vmem:[%s5 + $0x1d4] sm:$0xf]
    %v332 = vld [vmem:[%s5 + $0x1d8] sm:$0xf]
    %v333 = vld [vmem:[%s5 + $0x1dc] sm:$0xf]
    %v334 = vld [vmem:[%s5 + $0x1e0] sm:$0xf]
    %v335 = vld [vmem:[%s5 + $0x1e4] sm:$0xf]
    %v336 = vld [vmem:[%s5 + $0x1e8] sm:$0xf]
    %v337 = vld [vmem:[%s5 + $0x1ec] sm:$0xf]
    %v338 = vld [vmem:[%s5 + $0x1f0] sm:$0xf]
    %v339 = vld [vmem:[%s5 + $0x1f4] sm:$0xf]
    %v340 = vld [vmem:[%s5 + $0x1f8] sm:$0xf]
    %v341 = vld [vmem:[%s5 + $0x1fc] sm:$0xf]
    %v342 = vld [vmem:[%s5 + $0x200] sm:$0xf]
    %v343 = vld [vmem:[%s5 + $0x204] sm:$0xf]
    %v344 = vld [vmem:[%s5 + $0x208] sm:$0xf]
    %v345 = vld [vmem:[%s5 + $0x20c] sm:$0xf]
    %v346 = vld [vmem:[%s5 + $0x210] sm:$0xf]
    %v347 = vld [vmem:[%s5 + $0x214] sm:$0xf]
    %v348 = vld [vmem:[%s5 + $0x218] sm:$0xf]
    %v349 = vld [vmem:[%s5 + $0x21c] sm:$0xf]
    %v350 = vld [vmem:[%s5 + $0x220] sm:$0xf]
    %v351 = vld [vmem:[%s5 + $0x224] sm:$0xf]
    %v352 = vld [vmem:[%s5 + $0x228] sm:$0xf]
    %v353 = vld [vmem:[%s5 + $0x22c] sm:$0xf]
    %v354 = vld [vmem:[%s5 + $0x230] sm:$0xf]
    %v355 = vld [vmem:[%s5 + $0x234] sm:$0xf]
    %v356 = vld [vmem:[%s5 + $0x238] sm:$0xf]
    %v357 = vld [vmem:[%s5 + $0x23c] sm:$0xf]
    %v358 = vld [vmem:[%s5 + $0x240] sm:$0xf]
    %v359 = vld [vmem:[%s5 + $0x244] sm:$0xf]
    %v360 = vld [vmem:[%s5 + $0x248] sm:$0xf]
    %v361 = vld [vmem:[%s5 + $0x24c] sm:$0xf]
    %v362 = vld [vmem:[%s5 + $0x250] sm:$0xf]
    %v363 = vld [vmem:[%s5 + $0x254] sm:$0xf]
    %v364 = vld [vmem:[%s5 + $0x258] sm:$0xf]
    %v365 = vld [vmem:[%s5 + $0x25c] sm:$0xf]
    %v366 = vld [vmem:[%s5 + $0x260] sm:$0xf]
    %v367 = vld [vmem:[%s5 + $0x264] sm:$0xf]
    %v368 = vld [vmem:[%s5 + $0x268] sm:$0xf]
    %v369 = vld [vmem:[%s5 + $0x26c] sm:$0xf]
    %v370 = vld [vmem:[%s5 + $0x270] sm:$0xf]
    %v371 = vld [vmem:[%s5 + $0x274] sm:$0xf]
    %v372 = vld [vmem:[%s5 + $0x278] sm:$0xf]
    %v373 = vld [vmem:[%s5 + $0x27c] sm:$0xf]
    %v374 = vld [vmem:[%s5 + $0x280] sm:$0xf]
    %v375 = vld [vmem:[%s5 + $0x284] sm:$0xf]
    %v376 = vld [vmem:[%s5 + $0x288] sm:$0xf]
    %v377 = vld [vmem:[%s5 + $0x28c] sm:$0xf]
    %v378 = vld [vmem:[%s5 + $0x290] sm:$0xf]
    %v379 = vld [vmem:[%s5 + $0x294] sm:$0xf]
    %v380 = vld [vmem:[%s5 + $0x298] sm:$0xf]
    %v381 = vld [vmem:[%s5 + $0x29c] sm:$0xf]
    %v382 = vld [vmem:[%s5 + $0x2a0] sm:$0xf]
    %v383 = vld [vmem:[%s5 + $0x2a4] sm:$0xf]
    %v384 = vld [vmem:[%s5 + $0x2a8] sm:$0xf]
    %v385 = vld [vmem:[%s5 + $0x2ac] sm:$0xf]
    %v386 = vld [vmem:[%s5 + $0x2b0] sm:$0xf]
    %v387 = vld [vmem:[%s5 + $0x2b4] sm:$0xf]
    %v388 = vld [vmem:[%s5 + $0x2b8] sm:$0xf]
    %v389 = vld [vmem:[%s5 + $0x2bc] sm:$0xf]
    %v390 = vld [vmem:[%s5 + $0x2c0] sm:$0xf]
    %v391 = vld [vmem:[%s5 + $0x2c4] sm:$0xf]
    %v392 = vld [vmem:[%s5 + $0x2c8] sm:$0xf]
    %v393 = vld [vmem:[%s5 + $0x2cc] sm:$0xf]
    %v394 = vld [vmem:[%s5 + $0x2d0] sm:$0xf]
    %v395 = vld [vmem:[%s5 + $0x2d4] sm:$0xf]
    %v396 = vld [vmem:[%s5 + $0x2d8] sm:$0xf]
    %v397 = vld [vmem:[%s5 + $0x2dc] sm:$0xf]
    %v398 = vld [vmem:[%s5 + $0x2e0] sm:$0xf]
    %v399 = vld [vmem:[%s5 + $0x2e4] sm:$0xf]
    %v400 = vld [vmem:[%s5 + $0x2e8] sm:$0xf]
    %v401 = vld [vmem:[%s5 + $0x2ec] sm:$0xf]
    %v402 = vld [vmem:[%s5 + $0x2f0] sm:$0xf]
    %v403 = vld [vmem:[%s5 + $0x2f4] sm:$0xf]
    %v404 = vld [vmem:[%s5 + $0x2f8] sm:$0xf]
    %v405 = vld [vmem:[%s5 + $0x2fc] sm:$0xf]
    %v406 = vld [vmem:[%s5 + $0x300] sm:$0xf]
    %v407 = vld [vmem:[%s5 + $0x304] sm:$0xf]
    %v408 = vld [vmem:[%s5 + $0x308] sm:$0xf]
    %v409 = vld [vmem:[%s5 + $0x30c] sm:$0xf]
    %v410 = vld [vmem:[%s5 + $0x310] sm:$0xf]
    %v411 = vld [vmem:[%s5 + $0x314] sm:$0xf]
    %v412 = vld [vmem:[%s5 + $0x318] sm:$0xf]
    %v413 = vld [vmem:[%s5 + $0x31c] sm:$0xf]
    %v414 = vld [vmem:[%s5 + $0x320] sm:$0xf]
    %v415 = vld [vmem:[%s5 + $0x324] sm:$0xf]
    %v416 = vld [vmem:[%s5 + $0x328] sm:$0xf]
    %v417 = vld [vmem:[%s5 + $0x32c] sm:$0xf]
    %v418 = vld [vmem:[%s5 + $0x330] sm:$0xf]
    %v419 = vld [vmem:[%s5 + $0x334] sm:$0xf]
    %v420 = vld [vmem:[%s5 + $0x338] sm:$0xf]
    %v421 = vld [vmem:[%s5 + $0x33c] sm:$0xf]
    %v422 = vld [vmem:[%s5 + $0x340] sm:$0xf]
    %v423 = vld [vmem:[%s5 + $0x344] sm:$0xf]
    %v424 = vld [vmem:[%s5 + $0x348] sm:$0xf]
    %v425 = vld [vmem:[%s5 + $0x34c] sm:$0xf]
    %v426 = vld [vmem:[%s5 + $0x350] sm:$0xf]
    %v427 = vld [vmem:[%s5 + $0x354] sm:$0xf]
    %v428 = vld [vmem:[%s5 + $0x358] sm:$0xf]
    %v429 = vld [vmem:[%s5 + $0x35c] sm:$0xf]
    %v430 = vld [vmem:[%s5 + $0x360] sm:$0xf]
    %v431 = vld [vmem:[%s5 + $0x364] sm:$0xf]
    %v432 = vld [vmem:[%s5 + $0x368] sm:$0xf]
    %v433 = vld [vmem:[%s5 + $0x36c] sm:$0xf]
    %v434 = vld [vmem:[%s5 + $0x370] sm:$0xf]
    %v435 = vld [vmem:[%s5 + $0x374] sm:$0xf]
    %v436 = vld [vmem:[%s5 + $0x378] sm:$0xf]
    %v437 = vld [vmem:[%s5 + $0x37c] sm:$0xf]
    %v438 = vld [vmem:[%s5 + $0x380] sm:$0xf]
    %v439 = vld [vmem:[%s5 + $0x384] sm:$0xf]
    %v440 = vld [vmem:[%s5 + $0x388] sm:$0xf]
    %v441 = vld [vmem:[%s5 + $0x38c] sm:$0xf]
    %v442 = vld [vmem:[%s5 + $0x390] sm:$0xf]
    %v443 = vld [vmem:[%s5 + $0x394] sm:$0xf]
    %v444 = vld [vmem:[%s5 + $0x398] sm:$0xf]
    %v445 = vld [vmem:[%s5 + $0x39c] sm:$0xf]
    %v446 = vld [vmem:[%s5 + $0x3a0] sm:$0xf]
    %v447 = vld [vmem:[%s5 + $0x3a4] sm:$0xf]
    %v448 = vld [vmem:[%s5 + $0x3a8] sm:$0xf]
    %v449 = vld [vmem:[%s5 + $0x3ac] sm:$0xf]
    %v450 = vld [vmem:[%s5 + $0x3b0] sm:$0xf]
    %v451 = vld [vmem:[%s5 + $0x3b4] sm:$0xf]
    %v452 = vld [vmem:[%s5 + $0x3b8] sm:$0xf]
    %v453 = vld [vmem:[%s5 + $0x3bc] sm:$0xf]
    %v454 = vld [vmem:[%s5 + $0x3c0] sm:$0xf]
    %v455 = vld [vmem:[%s5 + $0x3c4] sm:$0xf]
    %v456 = vld [vmem:[%s5 + $0x3c8] sm:$0xf]
    %v457 = vld [vmem:[%s5 + $0x3cc] sm:$0xf]
    %v458 = vld [vmem:[%s5 + $0x3d0] sm:$0xf]
    %v459 = vld [vmem:[%s5 + $0x3d4] sm:$0xf]
    %v460 = vld [vmem:[%s5 + $0x3d8] sm:$0xf]
    %v461 = vld [vmem:[%s5 + $0x3dc] sm:$0xf]
    %v462 = vld [vmem:[%s5 + $0x3e0] sm:$0xf]
    %v463 = vld [vmem:[%s5 + $0x3e4] sm:$0xf]
    %v464 = vld [vmem:[%s5 + $0x3e8] sm:$0xf]
    %v465 = vld [vmem:[%s5 + $0x3ec] sm:$0xf]
    %v466 = vld [vmem:[%s5 + $0x3f0] sm:$0xf]
    %v467 = vld [vmem:[%s5 + $0x3f4] sm:$0xf]
    %v468 = vld [vmem:[%s5 + $0x3f8] sm:$0xf]
    %v469 = vld [vmem:[%s5 + $0x3fc] sm:$0xf]
    %v726 = vunpack.c.l.b16 %v214
    %v727 = vunpack.c.l.b16 %v215
    %v728 = vunpack.c.l.b16 %v216
    %v729 = vunpack.c.l.b16 %v217
    %v730 = vunpack.c.l.b16 %v218
    %v731 = vunpack.c.l.b16 %v219
    %v732 = vunpack.c.l.b16 %v220
    %v733 = vunpack.c.l.b16 %v221
    %v734 = vunpack.c.l.b16 %v222
    %v735 = vunpack.c.l.b16 %v223
    %v736 = vunpack.c.l.b16 %v224
    %v737 = vunpack.c.l.b16 %v225
    %v738 = vunpack.c.l.b16 %v226
    %v739 = vunpack.c.l.b16 %v227
    %v740 = vunpack.c.l.b16 %v228
    %v741 = vunpack.c.l.b16 %v229
    %v742 = vunpack.c.l.b16 %v230
    %v743 = vunpack.c.l.b16 %v231
    %v744 = vunpack.c.l.b16 %v232
    %v745 = vunpack.c.l.b16 %v233
    %v746 = vunpack.c.l.b16 %v234
    %v747 = vunpack.c.l.b16 %v235
    %v748 = vunpack.c.l.b16 %v236
    %v749 = vunpack.c.l.b16 %v237
    %v750 = vunpack.c.l.b16 %v238
    %v751 = vunpack.c.l.b16 %v239
    %v752 = vunpack.c.l.b16 %v240
    %v753 = vunpack.c.l.b16 %v241
    %v754 = vunpack.c.l.b16 %v242
    %v755 = vunpack.c.l.b16 %v243
    %v756 = vunpack.c.l.b16 %v244
    %v757 = vunpack.c.l.b16 %v245
    %v758 = vunpack.c.l.b16 %v246
    %v759 = vunpack.c.l.b16 %v247
    %v760 = vunpack.c.l.b16 %v248
    %v761 = vunpack.c.l.b16 %v249
    %v762 = vunpack.c.l.b16 %v250
    %v763 = vunpack.c.l.b16 %v251
    %v764 = vunpack.c.l.b16 %v252
    %v765 = vunpack.c.l.b16 %v253
    %v766 = vunpack.c.l.b16 %v254
    %v767 = vunpack.c.l.b16 %v255
    %v768 = vunpack.c.l.b16 %v256
    %v769 = vunpack.c.l.b16 %v257
    %v770 = vunpack.c.l.b16 %v258
    %v771 = vunpack.c.l.b16 %v259
    %v772 = vunpack.c.l.b16 %v260
    %v773 = vunpack.c.l.b16 %v261
    %v774 = vunpack.c.l.b16 %v262
    %v775 = vunpack.c.l.b16 %v263
    %v776 = vunpack.c.l.b16 %v264
    %v777 = vunpack.c.l.b16 %v265
    %v778 = vunpack.c.l.b16 %v266
    %v779 = vunpack.c.l.b16 %v267
    %v780 = vunpack.c.l.b16 %v268
    %v781 = vunpack.c.l.b16 %v269
    %v782 = vunpack.c.l.b16 %v270
    %v783 = vunpack.c.l.b16 %v271
    %v784 = vunpack.c.l.b16 %v272
    %v785 = vunpack.c.l.b16 %v273
    %v786 = vunpack.c.l.b16 %v274
    %v787 = vunpack.c.l.b16 %v275
    %v788 = vunpack.c.l.b16 %v276
    %v789 = vunpack.c.l.b16 %v277
    %v790 = vunpack.c.l.b16 %v278
    %v791 = vunpack.c.l.b16 %v279
    %v792 = vunpack.c.l.b16 %v280
    %v793 = vunpack.c.l.b16 %v281
    %v794 = vunpack.c.l.b16 %v282
    %v795 = vunpack.c.l.b16 %v283
    %v796 = vunpack.c.l.b16 %v284
    %v797 = vunpack.c.l.b16 %v285
    %v798 = vunpack.c.l.b16 %v286
    %v799 = vunpack.c.l.b16 %v287
    %v800 = vunpack.c.l.b16 %v288
    %v801 = vunpack.c.l.b16 %v289
    %v802 = vunpack.c.l.b16 %v290
    %v803 = vunpack.c.l.b16 %v291
    %v804 = vunpack.c.l.b16 %v292
    %v805 = vunpack.c.l.b16 %v293
    %v806 = vunpack.c.l.b16 %v294
    %v807 = vunpack.c.l.b16 %v295
    %v808 = vunpack.c.l.b16 %v296
    %v809 = vunpack.c.l.b16 %v297
    %v810 = vunpack.c.l.b16 %v298
    %v811 = vunpack.c.l.b16 %v299
    %v812 = vunpack.c.l.b16 %v300
    %v813 = vunpack.c.l.b16 %v301
    %v814 = vunpack.c.l.b16 %v302
    %v815 = vunpack.c.l.b16 %v303
    %v816 = vunpack.c.l.b16 %v304
    %v817 = vunpack.c.l.b16 %v305
    %v818 = vunpack.c.l.b16 %v306
    %v819 = vunpack.c.l.b16 %v307
    %v820 = vunpack.c.l.b16 %v308
    %v821 = vunpack.c.l.b16 %v309
    %v822 = vunpack.c.l.b16 %v310
    %v823 = vunpack.c.l.b16 %v311
    %v824 = vunpack.c.l.b16 %v312
    %v825 = vunpack.c.l.b16 %v313
    %v826 = vunpack.c.l.b16 %v314
    %v827 = vunpack.c.l.b16 %v315
    %v828 = vunpack.c.l.b16 %v316
    %v829 = vunpack.c.l.b16 %v317
    %v830 = vunpack.c.l.b16 %v318
    %v831 = vunpack.c.l.b16 %v319
    %v832 = vunpack.c.l.b16 %v320
    %v833 = vunpack.c.l.b16 %v321
    %v834 = vunpack.c.l.b16 %v322
    %v835 = vunpack.c.l.b16 %v323
    %v836 = vunpack.c.l.b16 %v324
    %v837 = vunpack.c.l.b16 %v325
    %v838 = vunpack.c.l.b16 %v326
    %v839 = vunpack.c.l.b16 %v327
    %v840 = vunpack.c.l.b16 %v328
    %v841 = vunpack.c.l.b16 %v329
    %v842 = vunpack.c.l.b16 %v330
    %v843 = vunpack.c.l.b16 %v331
    %v844 = vunpack.c.l.b16 %v332
    %v845 = vunpack.c.l.b16 %v333
    %v846 = vunpack.c.l.b16 %v334
    %v847 = vunpack.c.l.b16 %v335
    %v848 = vunpack.c.l.b16 %v336
    %v849 = vunpack.c.l.b16 %v337
    %v850 = vunpack.c.l.b16 %v338
    %v851 = vunpack.c.l.b16 %v339
    %v852 = vunpack.c.l.b16 %v340
    %v853 = vunpack.c.l.b16 %v341
    %v854 = vunpack.c.l.b16 %v342
    %v855 = vunpack.c.l.b16 %v343
    %v856 = vunpack.c.l.b16 %v344
    %v857 = vunpack.c.l.b16 %v345
    %v858 = vunpack.c.l.b16 %v346
    %v859 = vunpack.c.l.b16 %v347
    %v860 = vunpack.c.l.b16 %v348
    %v861 = vunpack.c.l.b16 %v349
    %v862 = vunpack.c.l.b16 %v350
    %v863 = vunpack.c.l.b16 %v351
    %v864 = vunpack.c.l.b16 %v352
    %v865 = vunpack.c.l.b16 %v353
    %v866 = vunpack.c.l.b16 %v354
    %v867 = vunpack.c.l.b16 %v355
    %v868 = vunpack.c.l.b16 %v356
    %v869 = vunpack.c.l.b16 %v357
    %v870 = vunpack.c.l.b16 %v358
    %v871 = vunpack.c.l.b16 %v359
    %v872 = vunpack.c.l.b16 %v360
    %v873 = vunpack.c.l.b16 %v361
    %v874 = vunpack.c.l.b16 %v362
    %v875 = vunpack.c.l.b16 %v363
    %v876 = vunpack.c.l.b16 %v364
    %v877 = vunpack.c.l.b16 %v365
    %v878 = vunpack.c.l.b16 %v366
    %v879 = vunpack.c.l.b16 %v367
    %v880 = vunpack.c.l.b16 %v368
    %v881 = vunpack.c.l.b16 %v369
    %v882 = vunpack.c.l.b16 %v370
    %v883 = vunpack.c.l.b16 %v371
    %v884 = vunpack.c.l.b16 %v372
    %v885 = vunpack.c.l.b16 %v373
    %v886 = vunpack.c.l.b16 %v374
    %v887 = vunpack.c.l.b16 %v375
    %v888 = vunpack.c.l.b16 %v376
    %v889 = vunpack.c.l.b16 %v377
    %v890 = vunpack.c.l.b16 %v378
    %v891 = vunpack.c.l.b16 %v379
    %v892 = vunpack.c.l.b16 %v380
    %v893 = vunpack.c.l.b16 %v381
    %v894 = vunpack.c.l.b16 %v382
    %v895 = vunpack.c.l.b16 %v383
    %v896 = vunpack.c.l.b16 %v384
    %v897 = vunpack.c.l.b16 %v385
    %v898 = vunpack.c.l.b16 %v386
    %v899 = vunpack.c.l.b16 %v387
    %v900 = vunpack.c.l.b16 %v388
    %v901 = vunpack.c.l.b16 %v389
    %v902 = vunpack.c.l.b16 %v390
    %v903 = vunpack.c.l.b16 %v391
    %v904 = vunpack.c.l.b16 %v392
    %v905 = vunpack.c.l.b16 %v393
    %v906 = vunpack.c.l.b16 %v394
    %v907 = vunpack.c.l.b16 %v395
    %v908 = vunpack.c.l.b16 %v396
    %v909 = vunpack.c.l.b16 %v397
    %v910 = vunpack.c.l.b16 %v398
    %v911 = vunpack.c.l.b16 %v399
    %v912 = vunpack.c.l.b16 %v400
    %v913 = vunpack.c.l.b16 %v401
    %v914 = vunpack.c.l.b16 %v402
    %v915 = vunpack.c.l.b16 %v403
    %v916 = vunpack.c.l.b16 %v404
    %v917 = vunpack.c.l.b16 %v405
    %v918 = vunpack.c.l.b16 %v406
    %v919 = vunpack.c.l.b16 %v407
    %v920 = vunpack.c.l.b16 %v408
    %v921 = vunpack.c.l.b16 %v409
    %v922 = vunpack.c.l.b16 %v410
    %v923 = vunpack.c.l.b16 %v411
    %v924 = vunpack.c.l.b16 %v412
    %v925 = vunpack.c.l.b16 %v413
    %v926 = vunpack.c.l.b16 %v414
    %v927 = vunpack.c.l.b16 %v415
    %v928 = vunpack.c.l.b16 %v416
    %v929 = vunpack.c.l.b16 %v417
    %v930 = vunpack.c.l.b16 %v418
    %v931 = vunpack.c.l.b16 %v419
    %v932 = vunpack.c.l.b16 %v420
    %v933 = vunpack.c.l.b16 %v421
    %v934 = vunpack.c.l.b16 %v422
    %v935 = vunpack.c.l.b16 %v423
    %v936 = vunpack.c.l.b16 %v424
    %v937 = vunpack.c.l.b16 %v425
    %v938 = vunpack.c.l.b16 %v426
    %v939 = vunpack.c.l.b16 %v427
    %v940 = vunpack.c.l.b16 %v428
    %v941 = vunpack.c.l.b16 %v429
    %v942 = vunpack.c.l.b16 %v430
    %v943 = vunpack.c.l.b16 %v431
    %v944 = vunpack.c.l.b16 %v432
    %v945 = vunpack.c.l.b16 %v433
    %v946 = vunpack.c.l.b16 %v434
    %v947 = vunpack.c.l.b16 %v435
    %v948 = vunpack.c.l.b16 %v436
    %v949 = vunpack.c.l.b16 %v437
    %v950 = vunpack.c.l.b16 %v438
    %v951 = vunpack.c.l.b16 %v439
    %v952 = vunpack.c.l.b16 %v440
    %v953 = vunpack.c.l.b16 %v441
    %v954 = vunpack.c.l.b16 %v442
    %v955 = vunpack.c.l.b16 %v443
    %v956 = vunpack.c.l.b16 %v444
    %v957 = vunpack.c.l.b16 %v445
    %v958 = vunpack.c.l.b16 %v446
    %v959 = vunpack.c.l.b16 %v447
    %v960 = vunpack.c.l.b16 %v448
    %v961 = vunpack.c.l.b16 %v449
    %v962 = vunpack.c.l.b16 %v450
    %v963 = vunpack.c.l.b16 %v451
    %v964 = vunpack.c.l.b16 %v452
    %v965 = vunpack.c.l.b16 %v453
    %v966 = vunpack.c.l.b16 %v454
    %v967 = vunpack.c.l.b16 %v455
    %v968 = vunpack.c.l.b16 %v456
    %v969 = vunpack.c.l.b16 %v457
    %v970 = vunpack.c.l.b16 %v458
    %v971 = vunpack.c.l.b16 %v459
    %v972 = vunpack.c.l.b16 %v460
    %v973 = vunpack.c.l.b16 %v461
    %v974 = vunpack.c.l.b16 %v462
    %v975 = vunpack.c.l.b16 %v463
    %v976 = vunpack.c.l.b16 %v464
    %v977 = vunpack.c.l.b16 %v465
    %v978 = vunpack.c.l.b16 %v466
    %v979 = vunpack.c.l.b16 %v467
    %v980 = vunpack.c.l.b16 %v468
    %v981 = vunpack.c.l.b16 %v469
    %v982 = vpack.c.b16 %v727, %v726
    %v983 = vpack.c.b16 %v729, %v728
    %v984 = vpack.c.b16 %v731, %v730
    %v985 = vpack.c.b16 %v733, %v732
    %v986 = vpack.c.b16 %v735, %v734
    %v987 = vpack.c.b16 %v737, %v736
    %v988 = vpack.c.b16 %v739, %v738
    %v989 = vpack.c.b16 %v741, %v740
    %v990 = vpack.c.b16 %v743, %v742
    %v991 = vpack.c.b16 %v745, %v744
    %v992 = vpack.c.b16 %v747, %v746
    %v993 = vpack.c.b16 %v749, %v748
    %v994 = vpack.c.b16 %v751, %v750
    %v995 = vpack.c.b16 %v753, %v752
    %v996 = vpack.c.b16 %v755, %v754
    %v997 = vpack.c.b16 %v757, %v756
    %v998 = vpack.c.b16 %v759, %v758
    %v999 = vpack.c.b16 %v761, %v760
    %v1000 = vpack.c.b16 %v763, %v762
    %v1001 = vpack.c.b16 %v765, %v764
    %v1002 = vpack.c.b16 %v767, %v766
    %v1003 = vpack.c.b16 %v769, %v768
    %v1004 = vpack.c.b16 %v771, %v770
    %v1005 = vpack.c.b16 %v773, %v772
    %v1006 = vpack.c.b16 %v775, %v774
    %v1007 = vpack.c.b16 %v777, %v776
    %v1008 = vpack.c.b16 %v779, %v778
    %v1009 = vpack.c.b16 %v781, %v780
    %v1010 = vpack.c.b16 %v783, %v782
    %v1011 = vpack.c.b16 %v785, %v784
    %v1012 = vpack.c.b16 %v787, %v786
    %v1013 = vpack.c.b16 %v789, %v788
    %v1014 = vpack.c.b16 %v791, %v790
    %v1015 = vpack.c.b16 %v793, %v792
    %v1016 = vpack.c.b16 %v795, %v794
    %v1017 = vpack.c.b16 %v797, %v796
    %v1018 = vpack.c.b16 %v799, %v798
    %v1019 = vpack.c.b16 %v801, %v800
    %v1020 = vpack.c.b16 %v803, %v802
    %v1021 = vpack.c.b16 %v805, %v804
    %v1022 = vpack.c.b16 %v807, %v806
    %v1023 = vpack.c.b16 %v809, %v808
    %v1024 = vpack.c.b16 %v811, %v810
    %v1025 = vpack.c.b16 %v813, %v812
    %v1026 = vpack.c.b16 %v815, %v814
    %v1027 = vpack.c.b16 %v817, %v816
    %v1028 = vpack.c.b16 %v819, %v818
    %v1029 = vpack.c.b16 %v821, %v820
    %v1030 = vpack.c.b16 %v823, %v822
    %v1031 = vpack.c.b16 %v825, %v824
    %v1032 = vpack.c.b16 %v827, %v826
    %v1033 = vpack.c.b16 %v829, %v828
    %v1034 = vpack.c.b16 %v831, %v830
    %v1035 = vpack.c.b16 %v833, %v832
    %v1036 = vpack.c.b16 %v835, %v834
    %v1037 = vpack.c.b16 %v837, %v836
    %v1038 = vpack.c.b16 %v839, %v838
    %v1039 = vpack.c.b16 %v841, %v840
    %v1040 = vpack.c.b16 %v843, %v842
    %v1041 = vpack.c.b16 %v845, %v844
    %v1042 = vpack.c.b16 %v847, %v846
    %v1043 = vpack.c.b16 %v849, %v848
    %v1044 = vpack.c.b16 %v851, %v850
    %v1045 = vpack.c.b16 %v853, %v852
    %v1046 = vpack.c.b16 %v855, %v854
    %v1047 = vpack.c.b16 %v857, %v856
    %v1048 = vpack.c.b16 %v859, %v858
    %v1049 = vpack.c.b16 %v861, %v860
    %v1050 = vpack.c.b16 %v863, %v862
    %v1051 = vpack.c.b16 %v865, %v864
    %v1052 = vpack.c.b16 %v867, %v866
    %v1053 = vpack.c.b16 %v869, %v868
    %v1054 = vpack.c.b16 %v871, %v870
    %v1055 = vpack.c.b16 %v873, %v872
    %v1056 = vpack.c.b16 %v875, %v874
    %v1057 = vpack.c.b16 %v877, %v876
    %v1058 = vpack.c.b16 %v879, %v878
    %v1059 = vpack.c.b16 %v881, %v880
    %v1060 = vpack.c.b16 %v883, %v882
    %v1061 = vpack.c.b16 %v885, %v884
    %v1062 = vpack.c.b16 %v887, %v886
    %v1063 = vpack.c.b16 %v889, %v888
    %v1064 = vpack.c.b16 %v891, %v890
    %v1065 = vpack.c.b16 %v893, %v892
    %v1066 = vpack.c.b16 %v895, %v894
    %v1067 = vpack.c.b16 %v897, %v896
    %v1068 = vpack.c.b16 %v899, %v898
    %v1069 = vpack.c.b16 %v901, %v900
    %v1070 = vpack.c.b16 %v903, %v902
    %v1071 = vpack.c.b16 %v905, %v904
    %v1072 = vpack.c.b16 %v907, %v906
    %v1073 = vpack.c.b16 %v909, %v908
    %v1074 = vpack.c.b16 %v911, %v910
    %v1075 = vpack.c.b16 %v913, %v912
    %v1076 = vpack.c.b16 %v915, %v914
    %v1077 = vpack.c.b16 %v917, %v916
    %v1078 = vpack.c.b16 %v919, %v918
    %v1079 = vpack.c.b16 %v921, %v920
    %v1080 = vpack.c.b16 %v923, %v922
    %v1081 = vpack.c.b16 %v925, %v924
    %v1082 = vpack.c.b16 %v927, %v926
    %v1083 = vpack.c.b16 %v929, %v928
    %v1084 = vpack.c.b16 %v931, %v930
    %v1085 = vpack.c.b16 %v933, %v932
    %v1086 = vpack.c.b16 %v935, %v934
    %v1087 = vpack.c.b16 %v937, %v936
    %v1088 = vpack.c.b16 %v939, %v938
    %v1089 = vpack.c.b16 %v941, %v940
    %v1090 = vpack.c.b16 %v943, %v942
    %v1091 = vpack.c.b16 %v945, %v944
    %v1092 = vpack.c.b16 %v947, %v946
    %v1093 = vpack.c.b16 %v949, %v948
    %v1094 = vpack.c.b16 %v951, %v950
    %v1095 = vpack.c.b16 %v953, %v952
    %v1096 = vpack.c.b16 %v955, %v954
    %v1097 = vpack.c.b16 %v957, %v956
    %v1098 = vpack.c.b16 %v959, %v958
    %v1099 = vpack.c.b16 %v961, %v960
    %v1100 = vpack.c.b16 %v963, %v962
    %v1101 = vpack.c.b16 %v965, %v964
    %v1102 = vpack.c.b16 %v967, %v966
    %v1103 = vpack.c.b16 %v969, %v968
    %v1104 = vpack.c.b16 %v971, %v970
    %v1105 = vpack.c.b16 %v973, %v972
    %v1106 = vpack.c.b16 %v975, %v974
    %v1107 = vpack.c.b16 %v977, %v976
    %v1108 = vpack.c.b16 %v979, %v978
    %v1109 = vpack.c.b16 %v981, %v980
    %1238 = vmatpush.bf16.msra.mxu0 %v989
    %1239 = vmatpush.bf16.msra.mxu0 %v988
    %1240 = vmatpush.bf16.msra.mxu0 %v987
    %1241 = vmatpush.bf16.msra.mxu0 %v986
    %1242 = vmatpush.bf16.msra.mxu0 %v985
    %1243 = vmatpush.bf16.msra.mxu0 %v984
    %1244 = vmatpush.bf16.msra.mxu0 %v983
    %1245 = vmatpush.bf16.msra.mxu0 %v982
    %1246 = vmatmul.bf16.gmra.mxu0 %v197
    %v1247 = vpop.f32.mrf.mxu0
    %v1248 = vadd.f32 0.0, %v1247
    %v1249 = vpop.f32.mrf.mxu0
    %1250 = vdwg.mxu0
    %1251 = vmatpush.bf16.msra.mxu0 %v997
    %1252 = vmatpush.bf16.msra.mxu0 %v996
    %1253 = vmatpush.bf16.msra.mxu0 %v995
    %1254 = vmatpush.bf16.msra.mxu0 %v994
    %1255 = vmatpush.bf16.msra.mxu0 %v993
    %1256 = vmatpush.bf16.msra.mxu0 %v992
    %1257 = vmatpush.bf16.msra.mxu0 %v991
    %1258 = vmatpush.bf16.msra.mxu0 %v990
    %1259 = vmatmul.bf16.gmra.mxu0 %v198
    %v1260 = vpop.f32.mrf.mxu0
    %v1261 = vadd.f32 %v1248, %v1260
    %v1262 = vpop.f32.mrf.mxu0
    %1263 = vdwg.mxu0
    %1264 = vmatpush.bf16.msra.mxu0 %v1005
    %1265 = vmatpush.bf16.msra.mxu0 %v1004
    %1266 = vmatpush.bf16.msra.mxu0 %v1003
    %1267 = vmatpush.bf16.msra.mxu0 %v1002
    %1268 = vmatpush.bf16.msra.mxu0 %v1001
    %1269 = vmatpush.bf16.msra.mxu0 %v1000
    %1270 = vmatpush.bf16.msra.mxu0 %v999
    %1271 = vmatpush.bf16.msra.mxu0 %v998
    %1272 = vmatmul.bf16.gmra.mxu0 %v199
    %v1273 = vpop.f32.mrf.mxu0
    %v1274 = vadd.f32 %v1261, %v1273
    %v1275 = vpop.f32.mrf.mxu0
    %1276 = vdwg.mxu0
    %1277 = vmatpush.bf16.msra.mxu0 %v1013
    %1278 = vmatpush.bf16.msra.mxu0 %v1012
    %1279 = vmatpush.bf16.msra.mxu0 %v1011
    %1280 = vmatpush.bf16.msra.mxu0 %v1010
    %1281 = vmatpush.bf16.msra.mxu0 %v1009
    %1282 = vmatpush.bf16.msra.mxu0 %v1008
    %1283 = vmatpush.bf16.msra.mxu0 %v1007
    %1284 = vmatpush.bf16.msra.mxu0 %v1006
    %1285 = vmatmul.bf16.gmra.mxu0 %v200
    %v1286 = vpop.f32.mrf.mxu0
    %v1287 = vadd.f32 %v1274, %v1286
    %v1288 = vpop.f32.mrf.mxu0
    %1289 = vdwg.mxu0
    %1290 = vmatpush.bf16.msra.mxu0 %v1021
    %1291 = vmatpush.bf16.msra.mxu0 %v1020
    %1292 = vmatpush.bf16.msra.mxu0 %v1019
    %1293 = vmatpush.bf16.msra.mxu0 %v1018
    %1294 = vmatpush.bf16.msra.mxu0 %v1017
    %1295 = vmatpush.bf16.msra.mxu0 %v1016
    %1296 = vmatpush.bf16.msra.mxu0 %v1015
    %1297 = vmatpush.bf16.msra.mxu0 %v1014
    %1298 = vmatmul.bf16.gmra.mxu0 %v201
    %v1299 = vpop.f32.mrf.mxu0
    %v1300 = vadd.f32 %v1287, %v1299
    %v1301 = vpop.f32.mrf.mxu0
    %1302 = vdwg.mxu0
    %1303 = vmatpush.bf16.msra.mxu0 %v1029
    %1304 = vmatpush.bf16.msra.mxu0 %v1028
    %1305 = vmatpush.bf16.msra.mxu0 %v1027
    %1306 = vmatpush.bf16.msra.mxu0 %v1026
    %1307 = vmatpush.bf16.msra.mxu0 %v1025
    %1308 = vmatpush.bf16.msra.mxu0 %v1024
    %1309 = vmatpush.bf16.msra.mxu0 %v1023
    %1310 = vmatpush.bf16.msra.mxu0 %v1022
    %1311 = vmatmul.bf16.gmra.mxu0 %v202
    %v1312 = vpop.f32.mrf.mxu0
    %v1313 = vadd.f32 %v1300, %v1312
    %v1314 = vpop.f32.mrf.mxu0
    %1315 = vdwg.mxu0
    %1316 = vmatpush.bf16.msra.mxu0 %v1037
    %1317 = vmatpush.bf16.msra.mxu0 %v1036
    %1318 = vmatpush.bf16.msra.mxu0 %v1035
    %1319 = vmatpush.bf16.msra.mxu0 %v1034
    %1320 = vmatpush.bf16.msra.mxu0 %v1033
    %1321 = vmatpush.bf16.msra.mxu0 %v1032
    %1322 = vmatpush.bf16.msra.mxu0 %v1031
    %1323 = vmatpush.bf16.msra.mxu0 %v1030
    %1324 = vmatmul.bf16.gmra.mxu0 %v203
    %v1325 = vpop.f32.mrf.mxu0
    %v1326 = vadd.f32 %v1313, %v1325
    %v1327 = vpop.f32.mrf.mxu0
    %1328 = vdwg.mxu0
    %1329 = vmatpush.bf16.msra.mxu0 %v1045
    %1330 = vmatpush.bf16.msra.mxu0 %v1044
    %1331 = vmatpush.bf16.msra.mxu0 %v1043
    %1332 = vmatpush.bf16.msra.mxu0 %v1042
    %1333 = vmatpush.bf16.msra.mxu0 %v1041
    %1334 = vmatpush.bf16.msra.mxu0 %v1040
    %1335 = vmatpush.bf16.msra.mxu0 %v1039
    %1336 = vmatpush.bf16.msra.mxu0 %v1038
    %1337 = vmatmul.bf16.gmra.mxu0 %v204
    %v1338 = vpop.f32.mrf.mxu0
    %v1339 = vadd.f32 %v1326, %v1338
    %v1340 = vpop.f32.mrf.mxu0
    %1341 = vdwg.mxu0
    %1342 = vmatpush.bf16.msra.mxu0 %v1053
    %1343 = vmatpush.bf16.msra.mxu0 %v1052
    %1344 = vmatpush.bf16.msra.mxu0 %v1051
    %1345 = vmatpush.bf16.msra.mxu0 %v1050
    %1346 = vmatpush.bf16.msra.mxu0 %v1049
    %1347 = vmatpush.bf16.msra.mxu0 %v1048
    %1348 = vmatpush.bf16.msra.mxu0 %v1047
    %1349 = vmatpush.bf16.msra.mxu0 %v1046
    %1350 = vmatmul.bf16.gmra.mxu0 %v205
    %v1351 = vpop.f32.mrf.mxu0
    %v1352 = vadd.f32 %v1339, %v1351
    %v1353 = vpop.f32.mrf.mxu0
    %1354 = vdwg.mxu0
    %1355 = vmatpush.bf16.msra.mxu0 %v1061
    %1356 = vmatpush.bf16.msra.mxu0 %v1060
    %1357 = vmatpush.bf16.msra.mxu0 %v1059
    %1358 = vmatpush.bf16.msra.mxu0 %v1058
    %1359 = vmatpush.bf16.msra.mxu0 %v1057
    %1360 = vmatpush.bf16.msra.mxu0 %v1056
    %1361 = vmatpush.bf16.msra.mxu0 %v1055
    %1362 = vmatpush.bf16.msra.mxu0 %v1054
    %1363 = vmatmul.bf16.gmra.mxu0 %v206
    %v1364 = vpop.f32.mrf.mxu0
    %v1365 = vadd.f32 %v1352, %v1364
    %v1366 = vpop.f32.mrf.mxu0
    %1367 = vdwg.mxu0
    %1368 = vmatpush.bf16.msra.mxu0 %v1069
    %1369 = vmatpush.bf16.msra.mxu0 %v1068
    %1370 = vmatpush.bf16.msra.mxu0 %v1067
    %1371 = vmatpush.bf16.msra.mxu0 %v1066
    %1372 = vmatpush.bf16.msra.mxu0 %v1065
    %1373 = vmatpush.bf16.msra.mxu0 %v1064
    %1374 = vmatpush.bf16.msra.mxu0 %v1063
    %1375 = vmatpush.bf16.msra.mxu0 %v1062
    %1376 = vmatmul.bf16.gmra.mxu0 %v207
    %v1377 = vpop.f32.mrf.mxu0
    %v1378 = vadd.f32 %v1365, %v1377
    %v1379 = vpop.f32.mrf.mxu0
    %1380 = vdwg.mxu0
    %1381 = vmatpush.bf16.msra.mxu0 %v1077
    %1382 = vmatpush.bf16.msra.mxu0 %v1076
    %1383 = vmatpush.bf16.msra.mxu0 %v1075
    %1384 = vmatpush.bf16.msra.mxu0 %v1074
    %1385 = vmatpush.bf16.msra.mxu0 %v1073
    %1386 = vmatpush.bf16.msra.mxu0 %v1072
    %1387 = vmatpush.bf16.msra.mxu0 %v1071
    %1388 = vmatpush.bf16.msra.mxu0 %v1070
    %1389 = vmatmul.bf16.gmra.mxu0 %v208
    %v1390 = vpop.f32.mrf.mxu0
    %v1391 = vadd.f32 %v1378, %v1390
    %v1392 = vpop.f32.mrf.mxu0
    %1393 = vdwg.mxu0
    %1394 = vmatpush.bf16.msra.mxu0 %v1085
    %1395 = vmatpush.bf16.msra.mxu0 %v1084
    %1396 = vmatpush.bf16.msra.mxu0 %v1083
    %1397 = vmatpush.bf16.msra.mxu0 %v1082
    %1398 = vmatpush.bf16.msra.mxu0 %v1081
    %1399 = vmatpush.bf16.msra.mxu0 %v1080
    %1400 = vmatpush.bf16.msra.mxu0 %v1079
    %1401 = vmatpush.bf16.msra.mxu0 %v1078
    %1402 = vmatmul.bf16.gmra.mxu0 %v209
    %v1403 = vpop.f32.mrf.mxu0
    %v1404 = vadd.f32 %v1391, %v1403
    %v1405 = vpop.f32.mrf.mxu0
    %1406 = vdwg.mxu0
    %1407 = vmatpush.bf16.msra.mxu0 %v1093
    %1408 = vmatpush.bf16.msra.mxu0 %v1092
    %1409 = vmatpush.bf16.msra.mxu0 %v1091
    %1410 = vmatpush.bf16.msra.mxu0 %v1090
    %1411 = vmatpush.bf16.msra.mxu0 %v1089
    %1412 = vmatpush.bf16.msra.mxu0 %v1088
    %1413 = vmatpush.bf16.msra.mxu0 %v1087
    %1414 = vmatpush.bf16.msra.mxu0 %v1086
    %1415 = vmatmul.bf16.gmra.mxu0 %v210
    %v1416 = vpop.f32.mrf.mxu0
    %v1417 = vadd.f32 %v1404, %v1416
    %v1418 = vpop.f32.mrf.mxu0
    %1419 = vdwg.mxu0
    %1420 = vmatpush.bf16.msra.mxu0 %v1101
    %1421 = vmatpush.bf16.msra.mxu0 %v1100
    %1422 = vmatpush.bf16.msra.mxu0 %v1099
    %1423 = vmatpush.bf16.msra.mxu0 %v1098
    %1424 = vmatpush.bf16.msra.mxu0 %v1097
    %1425 = vmatpush.bf16.msra.mxu0 %v1096
    %1426 = vmatpush.bf16.msra.mxu0 %v1095
    %1427 = vmatpush.bf16.msra.mxu0 %v1094
    %1428 = vmatmul.bf16.gmra.mxu0 %v211
    %v1429 = vpop.f32.mrf.mxu0
    %v1430 = vadd.f32 %v1417, %v1429
    %v1431 = vpop.f32.mrf.mxu0
    %1432 = vdwg.mxu0
    %1433 = vmatpush.bf16.msra.mxu0 %v1109
    %1434 = vmatpush.bf16.msra.mxu0 %v1108
    %1435 = vmatpush.bf16.msra.mxu0 %v1107
    %1436 = vmatpush.bf16.msra.mxu0 %v1106
    %1437 = vmatpush.bf16.msra.mxu0 %v1105
    %1438 = vmatpush.bf16.msra.mxu0 %v1104
    %1439 = vmatpush.bf16.msra.mxu0 %v1103
    %1440 = vmatpush.bf16.msra.mxu0 %v1102
    %1441 = vmatmul.bf16.gmra.mxu0 %v212
    %v1442 = vpop.f32.mrf.mxu0
    %v1443 = vadd.f32 %v1430, %v1442
    %v1444 = vpop.f32.mrf.mxu0
    %1445 = vdwg.mxu0
    %v1446 = vadd.f32 %v213, %v1443
    %1447 = vst [vmem:[#allocation2] sm:$0xff] %v1446
    // Predicated region
    $region38: #{psld_time_ce_loss.3} parent=1 // pred_check
      %p1448 = pneg %p33
    $region39: #{psld_time_ce_loss.3} parent=1 // pred_check_branch
      %1450 = sbr.rel (%p1448) target = $region41
    $region40: #{psld_time_ce_loss.3} parent=1 // pred_region
      %v1451 = vld [vmem:[#allocation2] sm:$0xff]
      %v1452 = vld [vmem:[%s7] sm:$0xff]
      %v1453 = vlaneseq
      %v1454 = vand.u32 %v1453, 127
      %1455 = vset.pattern.permute.xlu0 0
      %1456 = vperm.xlu0 %1455, %v1452
      %v1457 = vpop.permute.xlu0 %1456
      %vm1458 = vcmp.eq.s32.totalorder %v1454, %v1457
      %v1459 = vsel %vm1458, 1, 0
      %v1460 = vcvt.s32.f32 %v1459
      %1461 = vmax.xlane.f32.xlu0 %v1451
      %v1462 = vpop.xlane.xlu0 %1461
      %v1463 = vsub.f32 %v1451, %v1462
      %v1464 = vmul.f32 %v1463, 1.442695
      %v1465 = vpow.pop %v1464
      %1466 = vadd.xlane.f32.xlu0 %v1465
      %v1467 = vpop.xlane.xlu0 %1466
      %v1468 = vlog2.pop %v1467
      %v1469 = vmul.f32 %v1468, 0.6931472
      %v1470 = vadd.f32 %v1462, %v1469
      %v1471 = vmul.f32 %v1451, %v1460
      %1472 = vadd.xlane.f32.xlu0 %v1471
      %v1473 = vpop.xlane.xlu0 %1472
      %v1474 = vsub.f32 %v1470, %v1473
      %v1475 = vrot.slane %v1474, 4
      %v1476 = vadd.f32 %v1474, %v1475
      %v1477 = vrot.slane %v1476, 2
      %v1478 = vadd.f32 %v1476, %v1477
      %v1479 = vrot.slane %v1478, 1
      %v1480 = vadd.f32 %v1478, %v1479
      %v1481 = vrcp.pop 8.0
      %v1482 = vmul.f32 8.0, %v1481
      %v1483 = vsub.f32 1.0, %v1482
      %v1484 = vmul.f32 %v1481, %v1483
      %v1485 = vadd.f32 %v1481, %v1484
      %vm1486 = vweird.f32 %v1481
      %v1487 = vsel %vm1486, %v1481, %v1485
      %v1488 = vmul.f32 %v1480, %v1487
      %vm1489 = vcmask 0
      %1490 = vst.msk [vmem:[#allocation3] sm:$0x1] %vm1489, %v1488
      %vm1491 = vcmp.eq.f32.partialorder %v1451, %v1462
      %v1492 = vsel %vm1491, %v1454, 128
      %v1493 = vand.u32 %v1492, 65535
      %v1494 = vshra.s32 %v1492, 16
      %v1495 = vcvt.s32.f32 %v1493
      %v1496 = vcvt.s32.f32 %v1494
      %1497 = vmin.xlane.f32.xlu0 %v1496
      %v1498 = vpop.xlane.xlu0 %1497
      %vm1499 = vcmp.eq.f32.partialorder %v1496, %v1498
      %v1500 = vsel %vm1499, %v1495, inf
      %1501 = vmin.xlane.f32.xlu0 %v1500
      %v1502 = vpop.xlane.xlu0 %1501
      %v1503 = vcvt.f32.s32 %v1502
      %v1504 = vcvt.f32.s32 %v1498
      %v1505 = vshll.u32 %v1504, 16
      %v1506 = vadd.s32 %v1505, %v1503
      %vm1507 = vcmp.eq.s32.totalorder %v1506, %v1452
      %v1508 = vsel %vm1507, 1, 0
      %v1509 = vcvt.s32.f32 %v1508
      %vm1510 = vcmask 7168
      %v1511 = vsel %vm1510, %v1509, 0.0
      %v1512 = vrot.slane %v1511, 4
      %v1513 = vadd.f32 %v1511, %v1512
      %v1514 = vrot.slane %v1513, 2
      %v1515 = vadd.f32 %v1513, %v1514
      %v1516 = vrot.slane %v1515, 1
      %v1517 = vadd.f32 %v1515, %v1516
      %v1518 = vmul.f32 %v1517, %v1487
      %1519 = vst.msk [vmem:[#allocation5] sm:$0x1] %vm1489, %v1518
    $region41: #{psld_time_ce_loss.3} parent=1 // pred_fallthru
      _
    // Predicated region
    $region42: #{psld_time_ce_loss.3} parent=1 // pred_check
      _
    $region43: #{psld_time_ce_loss.3} parent=1 // pred_check_branch
      %1521 = sbr.rel (0) target = $region45
    $region44: #{psld_time_ce_loss.3} parent=1 // pred_region
      %1523 = vsyncadd [#allocation4], 0
      %s1525 = sshll.u32 [#allocation3], 4
      %s1526 = int_to_ptr.vmem [resolvable:$true] %s1525
      %s1527 = sshll.u32 %s8, 4
      %s1528 = int_to_ptr.hbm [resolvable:$true] %s1527
      %1530 = dma.vmem_to_hbm [thread:$0]  %s1526, 16, %s1528, [#allocation4]
    $region45: #{psld_time_ce_loss.3} parent=1 // pred_fallthru
      _
    // Predicated region
    $region46: #{psld_time_ce_loss.3} parent=1 // pred_check
      _
    $region47: #{psld_time_ce_loss.3} parent=1 // pred_check_branch
      %1532 = sbr.rel (0) target = $region49
    $region48: #{psld_time_ce_loss.3} parent=1 // pred_region
      %1534 = vsyncadd [#allocation6], 0
      %s1536 = sshll.u32 [#allocation5], 4
      %s1537 = int_to_ptr.vmem [resolvable:$true] %s1536
      %s1538 = sshll.u32 %s9, 4
      %s1539 = int_to_ptr.hbm [resolvable:$true] %s1538
      %1541 = dma.vmem_to_hbm [thread:$0]  %s1537, 16, %s1539, [#allocation6]
    $region49: #{psld_time_ce_loss.3} parent=1 // pred_fallthru
      _
    // Predicated region
    $region50: #{psld_time_ce_loss.3} parent=1 // pred_check
      _
    $region51: #{psld_time_ce_loss.3} parent=1 // pred_check_branch
      %1543 = sbr.rel (0) target = $region53
    $region52: #{psld_time_ce_loss.3} parent=1 // pred_region
      %1545 = dma.done [#allocation4], 16
    $region53: #{psld_time_ce_loss.3} parent=1 // pred_fallthru
      _
    // Predicated region
    $region54: #{psld_time_ce_loss.3} parent=1 // pred_check
      _
    $region55: #{psld_time_ce_loss.3} parent=1 // pred_check_branch
      %1547 = sbr.rel (0) target = $region57
    $region56: #{psld_time_ce_loss.3} parent=1 // pred_region
      %1549 = dma.done [#allocation6], 16
    $region57: #{psld_time_ce_loss.3} parent=1 // pred_fallthru
      _
    %1550 = vsyncpa [#allocation4], 1
    %1551 = vsyncpa [#allocation6], 1

</llo_original>
